<compile_context>
chip_gen: v7x
topology: tpu7x:2x2x1
jax: 0.10.0
libtpu: 0.0.40
codegen_flags: <defaults>
</compile_context>

<pallas_src>
import functools

import jax
import jax.numpy as jnp
import numpy as np
from jax import lax
from jax.experimental import pallas as pl
from jax.experimental.pallas import tpu as pltpu


# ----------------------------------------------------------------------------
# Fused kernel: per batch-block (grid axis g) — both branch MLPs + classifier.
# ----------------------------------------------------------------------------
def _topo_lt_fused_kernel(
    o1_ref, o2_ref, sel_ref,            # activations (f32) + point-sum selector (bf16)
    w1f_ref, w2f_ref, wp_ref,           # fused branch weights (bf16)
    wc2_ref, wc3_ref,                   # classifier layer-2 weight / layer-3 row (bf16)
    bias_ref,                           # packed biases, f32 (4, W)
    cb3_ref,                            # classifier final bias, f32 (1,) in SMEM
    out_ref,                            # f32 (1, b_blk*q1*q2), lane-dense
    *, b_blk, q1, q2, h1, h2, c_cls,
):
    f32, bf16 = jnp.float32, jnp.bfloat16
    hf = h1 + h2
    bq1 = b_blk * q1

    def mm(a, b):
        return jnp.dot(a, b, preferred_element_type=f32)

    # --- branch inputs: mean over num_pts_per_vec as a 0/1 sum-selector matmul
    #     (the 1/P scale is folded into w1f's o1 columns); o2 used raw.
    x1 = mm(sel_ref[...], o1_ref[...].astype(bf16))                   # (bq1, Dc) f32
    x = jnp.concatenate([x1, o2_ref[...]], axis=0).astype(bf16)       # (R, Dc)

    b1f = bias_ref[0:1, :hf]
    b2f = bias_ref[1:2, :hf]
    bias_pair = bias_ref[2:3, :c_cls]
    bc2 = bias_ref[3:4, :c_cls]

    # --- fused branch MLP layers 1-2 (o1 branch in cols :h1, o2 in cols h1:)
    a1 = jnp.maximum(mm(x, w1f_ref[...]) + b1f, 0.0)                  # (R, hf)
    a2 = jnp.maximum(mm(a1.astype(bf16), w2f_ref[...]) + b2f, 0.0)    # (R, hf)

    # zero each row's other-branch half (garbage) before the composed matmul
    rows = a2.shape[0]
    ri = lax.broadcasted_iota(jnp.int32, (rows, hf), 0)
    ci = lax.broadcasted_iota(jnp.int32, (rows, hf), 1)
    keep = jnp.logical_xor(ri >= bq1, ci < h1)
    a2m = jnp.where(keep, a2, 0.0).astype(bf16)

    # branch layer-3 (linear) composed with classifier layer-1 (wrapper-side)
    p = mm(a2m, wp_ref[...])                                          # (R, c_cls) f32
    p1 = p[:bq1, :]                                                   # (bq1, c_cls)
    p2 = p[bq1:, :] + bias_pair                                       # (bq2, c_cls)

    # --- all (i, j) pairs per batch element (sublane broadcasts, no selector
    #     matmuls); the reshape merges a sublane-aligned leading dim only.
    blocks = []
    for b in range(b_blk):
        p1b = p1[b * q1:(b + 1) * q1, :]
        p2b = p2[b * q2:(b + 1) * q2, :]
        g = jnp.maximum(p1b[:, None, :] + p2b[None, :, :], 0.0)       # (q1, q2, c_cls)
        blocks.append(g.astype(bf16).reshape(q1 * q2, c_cls))
    gb = blocks[0] if b_blk == 1 else jnp.concatenate(blocks, axis=0)  # (Np, c_cls)

    h = jnp.maximum(mm(gb, wc2_ref[...]) + bc2, 0.0).astype(bf16)     # (Np, c_cls)

    # lane-dense final layer without materializing h.T
    out = lax.dot_general(wc3_ref[...], h, (((1,), (1,)), ((), ())),
                          preferred_element_type=f32)                 # (1, Np)
    out_ref[...] = out + cb3_ref[0]


# ----------------------------------------------------------------------------
# Wrapper-side helpers
# ----------------------------------------------------------------------------
def _rep_spec(shape):
    """Full-array operand, constant block index across the grid."""
    nd = len(shape)
    return pl.BlockSpec(shape, lambda g, _nd=nd: (0,) * _nd)


@functools.lru_cache(maxsize=None)
def _sum_selector(rows, num_pts):
    """(rows, rows*num_pts) 0/1 selector implementing the sum over points."""
    m = np.repeat(np.eye(rows, dtype=np.float32), num_pts, axis=1)
    return jnp.asarray(m, jnp.bfloat16)


def _num_grid_blocks(B, QP, Q2):
    """2 batch blocks (one per TensorCore) on v7x when the split stays aligned."""
    if B < 2 or B % 2:
        return 1          # TODO(synk): for B==1 on v7x, split the Q1*Q2 pair axis instead.
    bb = B // 2
    if (bb * QP) % 8 or (bb * Q2) % 8:
        return 1
    try:
        kind = jax.devices()[0].device_kind.lower()
    except Exception:
        kind = ""
    return 2 if ("v7" in kind or "7x" in kind) else 1


def pack_topo_lt_params(params, num_pts_per_vec=11):
    """One-time weight fusion/packing (pure layout math, done in f32)."""
    f32, bf16 = jnp.float32, jnp.bfloat16
    a_w1, a_b1, a_w2, a_b2, a_w3, a_b3 = [x.astype(f32) for x in params['mlp_o1']]
    b_w1, b_b1, b_w2, b_b2, b_w3, b_b3 = [x.astype(f32) for x in params['mlp_o2']]
    c_w1, c_b1, c_w2, c_b2, c_w3, c_b3 = [x.astype(f32) for x in params['classifier']]

    d1, h1 = a_w1.shape
    d2, h2 = b_w1.shape
    emb = a_w3.shape[1]                    # 128
    c_cls = c_w2.shape[1]                  # 256
    dc = max(d1, d2)
    hf = h1 + h2

    def pad_rows(a, r):
        return a if a.shape[0] == r else jnp.pad(a, ((0, r - a.shape[0]), (0, 0)))

    def pad_cols(a, c):
        return a if a.shape[1] == c else jnp.pad(a, ((0, 0), (0, c - a.shape[1])))

    # layer 1: both branches read the same input lanes; 1/P mean folded into o1 weight
    w1f = jnp.concatenate([pad_rows(a_w1, dc) / float(num_pts_per_vec),
                           pad_rows(b_w1, dc)], axis=1)               # (dc, hf)
    b1f = jnp.concatenate([a_b1, b_b1], axis=1)                       # (1, hf)
    # layer 2: block-diagonal
    w2f = jnp.zeros((hf, hf), f32)
    w2f = w2f.at[:h1, :h1].set(a_w2).at[h1:, h1:].set(b_w2)
    b2f = jnp.concatenate([a_b2, b_b2], axis=1)                       # (1, hf)
    # branch layer-3 (linear) composed with classifier layer-1 (concat split)
    r_w1a, r_w1b = c_w1[:emb], c_w1[emb:]
    wp = jnp.concatenate([a_w3 @ r_w1a, b_w3 @ r_w1b], axis=0)        # (hf, c_cls)
    bias_pair = a_b3 @ r_w1a + b_b3 @ r_w1b + c_b1                    # (1, c_cls)

    w = max(hf, c_cls)
    bias = jnp.concatenate([pad_cols(b1f, w), pad_cols(b2f, w),
                            pad_cols(bias_pair, w), pad_cols(c_b2, w)], axis=0)

    return dict(
        w1f=w1f.astype(bf16), w2f=w2f.astype(bf16), wp=wp.astype(bf16),
        wc2=c_w2.astype(bf16), wc3=c_w3.T.astype(bf16),               # (1, c_cls)
        bias=bias,                                                    # f32 (4, w)
        cb3=c_b3.reshape((1,)),                                       # f32 scalar (SMEM)
        dims=dict(dc=dc, h1=h1, h2=h2, c_cls=c_cls, num_pts=int(num_pts_per_vec)),
    )


# ----------------------------------------------------------------------------
# TopoLTHead.forward (Pallas)
# ----------------------------------------------------------------------------
def topo_lt_head_forward(packed, o1_feats, o2_feats):
    o1 = o1_feats[-1]                      # (B, Q1*P, D1)
    o2 = o2_feats[-1]                      # (B, Q2, D2)
    d = packed['dims']
    P, dc = d['num_pts'], d['dc']
    B, QP, D1 = o1.shape
    _, Q2, D2 = o2.shape
    Q1 = QP // P

    # flattened 2-D slabs; pad channel dim to common width (no-op when D1==D2)
    o1f = o1.reshape(B * QP, D1).astype(jnp.float32)
    o2f = o2.reshape(B * Q2, D2).astype(jnp.float32)
    if D1 < dc:
        o1f = jnp.pad(o1f, ((0, 0), (0, dc - D1)))
    if D2 < dc:
        o2f = jnp.pad(o2f, ((0, 0), (0, dc - D2)))

    G = _num_grid_blocks(B, QP, Q2)        # 1 on v5e/v6e, 2 on v7x when possible
    bb = B // G
    sel = _sum_selector(bb * Q1, P)        # cached, built once per shape
    np_blk = bb * Q1 * Q2

    kernel = functools.partial(
        _topo_lt_fused_kernel, b_blk=bb, q1=Q1, q2=Q2,
        h1=d['h1'], h2=d['h2'], c_cls=d['c_cls'])

    out = pl.pallas_call(
        kernel,
        out_shape=jax.ShapeDtypeStruct((1, B * Q1 * Q2), jnp.float32),
        grid=(G,),
        in_specs=[
            pl.BlockSpec((bb * QP, dc), lambda g: (g, 0)),
            pl.BlockSpec((bb * Q2, dc), lambda g: (g, 0)),
            _rep_spec(sel.shape),
            _rep_spec(packed['w1f'].shape),
            _rep_spec(packed['w2f'].shape),
            _rep_spec(packed['wp'].shape),
            _rep_spec(packed['wc2'].shape),
            _rep_spec(packed['wc3'].shape),
            _rep_spec(packed['bias'].shape),
            pl.BlockSpec(memory_space=pltpu.MemorySpace.SMEM),
        ],
        out_specs=pl.BlockSpec((1, np_blk), lambda g: (0, g)),
        compiler_params=pltpu.CompilerParams(dimension_semantics=("parallel",)),
    )(o1f, o2f, sel, packed['w1f'], packed['w2f'], packed['wp'],
      packed['wc2'], packed['wc3'], packed['bias'], packed['cb3'])
    return out.reshape(B, Q1, Q2, 1)
    # TODO(synk): add_pos / add_2d_query / is_detach branches and the
    # FocalLoss-based loss()/forward_train() assigner bookkeeping are not
    # exercised in the default config and are left out of the kernel.


# ----------------------------------------------------------------------------
# Parameter init (deterministic, synthetic) + pure-JAX reference
# ----------------------------------------------------------------------------
def init_linear(key, din, dout, scale=0.05):
    kw, kb = jax.random.split(key)
    return (scale * jax.random.normal(kw, (din, dout), jnp.float32),
            scale * jax.random.normal(kb, (1, dout), jnp.float32))


def init_mlp(key, din, dh, dout):
    k1, k2, k3 = jax.random.split(key, 3)
    w1, b1 = init_linear(k1, din, dh)
    w2, b2 = init_linear(k2, dh, dh)
    w3, b3 = init_linear(k3, dh, dout)
    return (w1, b1, w2, b2, w3, b3)


def init_topo_lt_head_params(key, in_channels_o1, in_channels_o2):
    k1, k2, k3 = jax.random.split(key, 3)
    return dict(
        mlp_o1=init_mlp(k1, in_channels_o1, in_channels_o1, 128),
        mlp_o2=init_mlp(k2, in_channels_o2, in_channels_o2, 128),
        classifier=init_mlp(k3, 256, 256, 1),
    )


def _mlp3_ref(x, w1, b1, w2, b2, w3, b3):
    h = jax.nn.relu(x @ w1 + b1)
    h = jax.nn.relu(h @ w2 + b2)
    return h @ w3 + b3


def topo_lt_head_ref(params, o1_feats, o2_feats, num_pts_per_vec=11):
    o1 = o1_feats[-1]
    o2 = o2_feats[-1]
    B, QP, D1 = o1.shape
    Q1 = QP // num_pts_per_vec
    o1m = o1.reshape(B, Q1, num_pts_per_vec, D1).mean(axis=2)
    e1 = _mlp3_ref(o1m, *params['mlp_o1'])
    e2 = _mlp3_ref(o2, *params['mlp_o2'])
    Q2 = e2.shape[1]
    t1 = jnp.broadcast_to(e1[:, :, None, :], (B, Q1, Q2, e1.shape[-1]))
    t2 = jnp.broadcast_to(e2[:, None, :, :], (B, Q1, Q2, e2.shape[-1]))
    rel = jnp.concatenate([t1, t2], axis=-1)
    return _mlp3_ref(rel, *params['classifier'])


if __name__ == "__main__":
    key = jax.random.PRNGKey(0)
    kp, k1, k2 = jax.random.split(key, 3)

    B = 2
    in_channels_o1 = 64
    in_channels_o2 = 64
    num_pts_per_vec = 11
    Q1 = 8            # o1 queries (after mean over points)
    Q2 = 16           # o2 queries
    num_dec_layers = 3  # o*_feats are per-decoder-layer lists; forward uses [-1]

    params = init_topo_lt_head_params(kp, in_channels_o1, in_channels_o2)
    packed = pack_topo_lt_params(params, num_pts_per_vec)   # one-time packing

    o1_feats = [jax.random.normal(jax.random.fold_in(k1, l),
                                  (B, Q1 * num_pts_per_vec, in_channels_o1),
                                  jnp.float32) for l in range(num_dec_layers)]
    o2_feats = [jax.random.normal(jax.random.fold_in(k2, l),
                                  (B, Q2, in_channels_o2),
                                  jnp.float32) for l in range(num_dec_layers)]

    rel_pred = topo_lt_head_forward(packed, o1_feats, o2_feats)
    rel_pred = jax.block_until_ready(rel_pred)

    ref = topo_lt_head_ref(params, o1_feats, o2_feats, num_pts_per_vec)
    # Kernel uses bf16 MXU operands (f32 accumulate); tolerance sized for that.
    np.testing.assert_allclose(np.asarray(rel_pred), np.asarray(ref),
                               rtol=2e-2, atol=5e-3)
    assert rel_pred.shape == (B, Q1, Q2, 1)
    print("KERNEL_OK")
</pallas_src>

<mosaic_0001>
module attributes {stable_mosaic.version = 11 : i64} {
  func.func @_topo_lt_fused_kernel(%arg0: i32, %arg1: memref<176x64xf32, #tpu.memory_space<vmem>>, %arg2: memref<32x64xf32, #tpu.memory_space<vmem>>, %arg3: memref<16x176xbf16, #tpu.memory_space<vmem>>, %arg4: memref<64x128xbf16, #tpu.memory_space<vmem>>, %arg5: memref<128x128xbf16, #tpu.memory_space<vmem>>, %arg6: memref<128x256xbf16, #tpu.memory_space<vmem>>, %arg7: memref<256x256xbf16, #tpu.memory_space<vmem>>, %arg8: memref<1x256xbf16, #tpu.memory_space<vmem>>, %arg9: memref<4x256xf32, #tpu.memory_space<vmem>>, %arg10: memref<1xf32, #tpu.memory_space<smem>>, %arg11: memref<1x256xf32, #tpu.memory_space<vmem>>) attributes {dimension_semantics = [#tpu.dimension_semantics<parallel>], iteration_bounds = array<i64: 1>, scalar_prefetch = 0 : i64, scratch_operands = 0 : i64, tpu.core_type = #tpu.core_type<tc>, window_params = [{transform_indices = @transform_0, window_bounds = array<i64: 176, 64>}, {transform_indices = @transform_1, window_bounds = array<i64: 32, 64>}, {pipeline_mode = #tpu.pipeline_mode<synchronous>, transform_indices = @transform_2, window_bounds = array<i64: 16, 176>}, {pipeline_mode = #tpu.pipeline_mode<synchronous>, transform_indices = @transform_3, window_bounds = array<i64: 64, 128>}, {pipeline_mode = #tpu.pipeline_mode<synchronous>, transform_indices = @transform_4, window_bounds = array<i64: 128, 128>}, {pipeline_mode = #tpu.pipeline_mode<synchronous>, transform_indices = @transform_5, window_bounds = array<i64: 128, 256>}, {pipeline_mode = #tpu.pipeline_mode<synchronous>, transform_indices = @transform_6, window_bounds = array<i64: 256, 256>}, {pipeline_mode = #tpu.pipeline_mode<synchronous>, transform_indices = @transform_7, window_bounds = array<i64: 1, 256>}, {pipeline_mode = #tpu.pipeline_mode<synchronous>, transform_indices = @transform_8, window_bounds = array<i64: 4, 256>}, {transform_indices = @transform_9, window_bounds = array<i64: 1>}, {transform_indices = @transform_10, window_bounds = array<i64: 1, 256>}]} {
    %c0 = arith.constant 0 : index
    %c0_0 = arith.constant 0 : index
    %0 = vector.load %arg3[%c0, %c0_0] : memref<16x176xbf16, #tpu.memory_space<vmem>>, vector<16x176xbf16>
    %c0_1 = arith.constant 0 : index
    %c0_2 = arith.constant 0 : index
    %1 = vector.load %arg1[%c0_1, %c0_2] : memref<176x64xf32, #tpu.memory_space<vmem>>, vector<176x64xf32>
    %2 = arith.truncf %1 : vector<176x64xf32> to vector<176x64xbf16>
    %cst = arith.constant dense<0.000000e+00> : vector<16x64xf32>
    %3 = tpu.matmul %0, %2, %cst {dimension_numbers = #tpu.dot_dimension_numbers<[1], [0], [0], [1], [0, 0, 1, 1], [], []>} : vector<16x176xbf16>, vector<176x64xbf16>, vector<16x64xf32> -> vector<16x64xf32>
    %c0_3 = arith.constant 0 : index
    %c0_4 = arith.constant 0 : index
    %4 = vector.load %arg2[%c0_3, %c0_4] : memref<32x64xf32, #tpu.memory_space<vmem>>, vector<32x64xf32>
    %5 = tpu.concatenate %3, %4 in 0 : vector<16x64xf32>, vector<32x64xf32> -> vector<48x64xf32>
    %6 = arith.truncf %5 : vector<48x64xf32> to vector<48x64xbf16>
    %c0_5 = arith.constant 0 : index
    %c0_6 = arith.constant 0 : index
    %7 = vector.load %arg9[%c0_5, %c0_6] : memref<4x256xf32, #tpu.memory_space<vmem>>, vector<1x128xf32>
    %c1 = arith.constant 1 : index
    %c0_7 = arith.constant 0 : index
    %8 = vector.load %arg9[%c1, %c0_7] : memref<4x256xf32, #tpu.memory_space<vmem>>, vector<1x128xf32>
    %c2 = arith.constant 2 : index
    %c0_8 = arith.constant 0 : index
    %9 = vector.load %arg9[%c2, %c0_8] : memref<4x256xf32, #tpu.memory_space<vmem>>, vector<1x256xf32>
    %c3 = arith.constant 3 : index
    %c0_9 = arith.constant 0 : index
    %10 = vector.load %arg9[%c3, %c0_9] : memref<4x256xf32, #tpu.memory_space<vmem>>, vector<1x256xf32>
    %c0_10 = arith.constant 0 : index
    %c0_11 = arith.constant 0 : index
    %11 = vector.load %arg4[%c0_10, %c0_11] : memref<64x128xbf16, #tpu.memory_space<vmem>>, vector<64x128xbf16>
    %cst_12 = arith.constant dense<0.000000e+00> : vector<48x128xf32>
    %12 = tpu.matmul %6, %11, %cst_12 {dimension_numbers = #tpu.dot_dimension_numbers<[1], [0], [0], [1], [0, 0, 1, 1], [], []>} : vector<48x64xbf16>, vector<64x128xbf16>, vector<48x128xf32> -> vector<48x128xf32>
    %13 = vector.broadcast %7 : vector<1x128xf32> to vector<48x128xf32>
    %14 = arith.addf %12, %13 : vector<48x128xf32>
    %cst_13 = arith.constant 0.000000e+00 : f32
    %15 = vector.broadcast %cst_13 : f32 to vector<48x128xf32>
    %16 = arith.maximumf %14, %15 : vector<48x128xf32>
    %17 = arith.truncf %16 : vector<48x128xf32> to vector<48x128xbf16>
    %c0_14 = arith.constant 0 : index
    %c0_15 = arith.constant 0 : index
    %18 = vector.load %arg5[%c0_14, %c0_15] : memref<128x128xbf16, #tpu.memory_space<vmem>>, vector<128x128xbf16>
    %cst_16 = arith.constant dense<0.000000e+00> : vector<48x128xf32>
    %19 = tpu.matmul %17, %18, %cst_16 {dimension_numbers = #tpu.dot_dimension_numbers<[1], [0], [0], [1], [0, 0, 1, 1], [], []>} : vector<48x128xbf16>, vector<128x128xbf16>, vector<48x128xf32> -> vector<48x128xf32>
    %20 = vector.broadcast %8 : vector<1x128xf32> to vector<48x128xf32>
    %21 = arith.addf %19, %20 : vector<48x128xf32>
    %cst_17 = arith.constant 0.000000e+00 : f32
    %22 = vector.broadcast %cst_17 : f32 to vector<48x128xf32>
    %23 = arith.maximumf %21, %22 : vector<48x128xf32>
    %24 = tpu.iota {dimensions = array<i32: 0>} : vector<48x128xi32>
    %25 = tpu.iota {dimensions = array<i32: 1>} : vector<48x128xi32>
    %c16_i32 = arith.constant 16 : i32
    %26 = vector.broadcast %c16_i32 : i32 to vector<48x128xi32>
    %27 = arith.cmpi sge, %24, %26 : vector<48x128xi32>
    %c64_i32 = arith.constant 64 : i32
    %28 = vector.broadcast %c64_i32 : i32 to vector<48x128xi32>
    %29 = arith.cmpi slt, %25, %28 : vector<48x128xi32>
    %30 = arith.xori %27, %29 : vector<48x128xi1>
    %cst_18 = arith.constant 0.000000e+00 : f32
    %31 = vector.broadcast %cst_18 : f32 to vector<48x128xf32>
    %32 = arith.select %30, %23, %31 : vector<48x128xi1>, vector<48x128xf32>
    %33 = arith.truncf %32 : vector<48x128xf32> to vector<48x128xbf16>
    %c0_19 = arith.constant 0 : index
    %c0_20 = arith.constant 0 : index
    %34 = vector.load %arg6[%c0_19, %c0_20] : memref<128x256xbf16, #tpu.memory_space<vmem>>, vector<128x256xbf16>
    %cst_21 = arith.constant dense<0.000000e+00> : vector<48x256xf32>
    %35 = tpu.matmul %33, %34, %cst_21 {dimension_numbers = #tpu.dot_dimension_numbers<[1], [0], [0], [1], [0, 0, 1, 1], [], []>} : vector<48x128xbf16>, vector<128x256xbf16>, vector<48x256xf32> -> vector<48x256xf32>
    %36 = vector.extract_strided_slice %35 {offsets = [0, 0], sizes = [16, 256], strides = [1, 1]} : vector<48x256xf32> to vector<16x256xf32>
    %37 = vector.extract_strided_slice %35 {offsets = [16, 0], sizes = [32, 256], strides = [1, 1]} : vector<48x256xf32> to vector<32x256xf32>
    %38 = vector.broadcast %9 : vector<1x256xf32> to vector<32x256xf32>
    %39 = arith.addf %37, %38 : vector<32x256xf32>
    %40 = vector.extract_strided_slice %36 {offsets = [0, 0], sizes = [8, 256], strides = [1, 1]} : vector<16x256xf32> to vector<8x256xf32>
    %41 = vector.extract_strided_slice %39 {offsets = [0, 0], sizes = [16, 256], strides = [1, 1]} : vector<32x256xf32> to vector<16x256xf32>
    %42 = vector.shape_cast %40 : vector<8x256xf32> to vector<8x1x256xf32>
    %43 = vector.shape_cast %41 : vector<16x256xf32> to vector<1x16x256xf32>
    %44 = vector.broadcast %42 : vector<8x1x256xf32> to vector<8x16x256xf32>
    %45 = vector.broadcast %43 : vector<1x16x256xf32> to vector<8x16x256xf32>
    %46 = arith.addf %44, %45 : vector<8x16x256xf32>
    %cst_22 = arith.constant 0.000000e+00 : f32
    %47 = vector.broadcast %cst_22 : f32 to vector<8x16x256xf32>
    %48 = arith.maximumf %46, %47 : vector<8x16x256xf32>
    %49 = arith.truncf %48 : vector<8x16x256xf32> to vector<8x16x256xbf16>
    %50 = vector.shape_cast %49 : vector<8x16x256xbf16> to vector<128x256xbf16>
    %51 = vector.extract_strided_slice %36 {offsets = [8, 0], sizes = [8, 256], strides = [1, 1]} : vector<16x256xf32> to vector<8x256xf32>
    %52 = vector.extract_strided_slice %39 {offsets = [16, 0], sizes = [16, 256], strides = [1, 1]} : vector<32x256xf32> to vector<16x256xf32>
    %53 = vector.shape_cast %51 : vector<8x256xf32> to vector<8x1x256xf32>
    %54 = vector.shape_cast %52 : vector<16x256xf32> to vector<1x16x256xf32>
    %55 = vector.broadcast %53 : vector<8x1x256xf32> to vector<8x16x256xf32>
    %56 = vector.broadcast %54 : vector<1x16x256xf32> to vector<8x16x256xf32>
    %57 = arith.addf %55, %56 : vector<8x16x256xf32>
    %cst_23 = arith.constant 0.000000e+00 : f32
    %58 = vector.broadcast %cst_23 : f32 to vector<8x16x256xf32>
    %59 = arith.maximumf %57, %58 : vector<8x16x256xf32>
    %60 = arith.truncf %59 : vector<8x16x256xf32> to vector<8x16x256xbf16>
    %61 = vector.shape_cast %60 : vector<8x16x256xbf16> to vector<128x256xbf16>
    %62 = tpu.concatenate %50, %61 in 0 : vector<128x256xbf16>, vector<128x256xbf16> -> vector<256x256xbf16>
    %c0_24 = arith.constant 0 : index
    %c0_25 = arith.constant 0 : index
    %63 = vector.load %arg7[%c0_24, %c0_25] : memref<256x256xbf16, #tpu.memory_space<vmem>>, vector<256x256xbf16>
    %cst_26 = arith.constant dense<0.000000e+00> : vector<256x256xf32>
    %64 = tpu.matmul %62, %63, %cst_26 {dimension_numbers = #tpu.dot_dimension_numbers<[1], [0], [0], [1], [0, 0, 1, 1], [], []>} : vector<256x256xbf16>, vector<256x256xbf16>, vector<256x256xf32> -> vector<256x256xf32>
    %65 = vector.broadcast %10 : vector<1x256xf32> to vector<256x256xf32>
    %66 = arith.addf %64, %65 : vector<256x256xf32>
    %cst_27 = arith.constant 0.000000e+00 : f32
    %67 = vector.broadcast %cst_27 : f32 to vector<256x256xf32>
    %68 = arith.maximumf %66, %67 : vector<256x256xf32>
    %69 = arith.truncf %68 : vector<256x256xf32> to vector<256x256xbf16>
    %c0_28 = arith.constant 0 : index
    %c0_29 = arith.constant 0 : index
    %70 = vector.load %arg8[%c0_28, %c0_29] : memref<1x256xbf16, #tpu.memory_space<vmem>>, vector<1x256xbf16>
    %cst_30 = arith.constant dense<0.000000e+00> : vector<1x256xf32>
    %71 = tpu.matmul %70, %69, %cst_30 {dimension_numbers = #tpu.dot_dimension_numbers<[1], [1], [0], [0], [0, 0, 1, 0], [], []>} : vector<1x256xbf16>, vector<256x256xbf16>, vector<1x256xf32> -> vector<1x256xf32>
    %c0_31 = arith.constant 0 : index
    %72 = memref.load %arg10[%c0_31] : memref<1xf32, #tpu.memory_space<smem>>
    %73 = vector.broadcast %72 : f32 to vector<1x256xf32>
    %74 = arith.addf %71, %73 : vector<1x256xf32>
    %c0_32 = arith.constant 0 : index
    %c0_33 = arith.constant 0 : index
    %75 = vector.load %arg11[%c0_32, %c0_33] : memref<1x256xf32, #tpu.memory_space<vmem>>, vector<1x256xf32>
    tpu.vector_store %arg11[%c0_32, %c0_33], %74 {strides = array<i32>} : memref<1x256xf32, #tpu.memory_space<vmem>>, vector<1x256xf32>,
    return
  }
  func.func @transform_0(%arg0: i32) -> (i32, i32) {
    %c0_i32 = arith.constant 0 : i32
    %c0_i32_0 = arith.constant 0 : i32
    return %arg0, %c0_i32 : i32, i32
  }
  func.func @transform_1(%arg0: i32) -> (i32, i32) {
    %c0_i32 = arith.constant 0 : i32
    %c0_i32_0 = arith.constant 0 : i32
    return %arg0, %c0_i32 : i32, i32
  }
  func.func @transform_2(%arg0: i32) -> (i32, i32) {
    %c0_i32 = arith.constant 0 : i32
    %c0_i32_0 = arith.constant 0 : i32
    %c0_i32_1 = arith.constant 0 : i32
    return %c0_i32, %c0_i32_0 : i32, i32
  }
  func.func @transform_3(%arg0: i32) -> (i32, i32) {
    %c0_i32 = arith.constant 0 : i32
    %c0_i32_0 = arith.constant 0 : i32
    %c0_i32_1 = arith.constant 0 : i32
    return %c0_i32, %c0_i32_0 : i32, i32
  }
  func.func @transform_4(%arg0: i32) -> (i32, i32) {
    %c0_i32 = arith.constant 0 : i32
    %c0_i32_0 = arith.constant 0 : i32
    %c0_i32_1 = arith.constant 0 : i32
    return %c0_i32, %c0_i32_0 : i32, i32
  }
  func.func @transform_5(%arg0: i32) -> (i32, i32) {
    %c0_i32 = arith.constant 0 : i32
    %c0_i32_0 = arith.constant 0 : i32
    %c0_i32_1 = arith.constant 0 : i32
    return %c0_i32, %c0_i32_0 : i32, i32
  }
  func.func @transform_6(%arg0: i32) -> (i32, i32) {
    %c0_i32 = arith.constant 0 : i32
    %c0_i32_0 = arith.constant 0 : i32
    %c0_i32_1 = arith.constant 0 : i32
    return %c0_i32, %c0_i32_0 : i32, i32
  }
  func.func @transform_7(%arg0: i32) -> (i32, i32) {
    %c0_i32 = arith.constant 0 : i32
    %c0_i32_0 = arith.constant 0 : i32
    %c0_i32_1 = arith.constant 0 : i32
    return %c0_i32, %c0_i32_0 : i32, i32
  }
  func.func @transform_8(%arg0: i32) -> (i32, i32) {
    %c0_i32 = arith.constant 0 : i32
    %c0_i32_0 = arith.constant 0 : i32
    %c0_i32_1 = arith.constant 0 : i32
    return %c0_i32, %c0_i32_0 : i32, i32
  }
  func.func @transform_9(%arg0: i32) -> i32 {
    %c0_i32 = arith.constant 0 : i32
    %c0_i32_0 = arith.constant 0 : i32
    return %c0_i32 : i32
  }
  func.func @transform_10(%arg0: i32) -> (i32, i32) {
    %c0_i32 = arith.constant 0 : i32
    %c0_i32_0 = arith.constant 0 : i32
    return %c0_i32, %arg0 : i32, i32
  }
}

</mosaic_0001>

<llo_original>
// kernel: tpu_custom_call.1
$region0: #{tpu_custom_call.1}
  #allocation0 [shape = 'u32[]', space=smem, size = 0x4, offset = 0x4, fixed_abs, tag = 'smem constant byte address 0x4 - core index']
  #allocation1 [shape = 'u32[144,128]{1,0:T(1,128)}', space=vmem, size = 0x12000, scoped, tag = 'internal scratch']
  #allocation2 [shape = 'f32[1]{0:T(128)S(6)}', space=smem, size = 0x200, scoped, tag = 'scoped memory for tpu_custom_call.1']
  %s0 = inlined_call_operand.vmem [shape: f32[176,64], index: 0, kind: input, shape index: {}]
  %s1 = inlined_call_operand.hbm [shape: f32[32,64], index: 1, kind: input, shape index: {}]
  %s2 = inlined_call_operand.hbm [shape: bf16[16,176], index: 2, kind: input, shape index: {}]
  %s3 = inlined_call_operand.hbm [shape: bf16[64,128], index: 3, kind: input, shape index: {}]
  %s4 = inlined_call_operand.vmem [shape: bf16[128,128], index: 4, kind: input, shape index: {}]
  %s5 = inlined_call_operand.hbm [shape: bf16[128,256], index: 5, kind: input, shape index: {}]
  %s6 = inlined_call_operand.vmem [shape: bf16[256,256], index: 6, kind: input, shape index: {}]
  %s7 = inlined_call_operand.vmem [shape: bf16[1,256], index: 7, kind: input, shape index: {}]
  %s8 = inlined_call_operand.vmem [shape: f32[4,256], index: 8, kind: input, shape index: {}]
  %s9 = inlined_call_operand.<no memory space> [shape: f32[1], index: 9, kind: input, shape index: {}]
  %s10 = inlined_call_operand.hbm [shape: f32[1,256], index: 10, kind: output, shape index: {}]
  %s11 = sld [smem:[#allocation0]]
  $region66: #{tpu_custom_call.1} parent=0
    _
  %s13 = ssub.s32 1, %s11
  %s14 = scalar_select 0, %s13, %s11
  %15 = sst [smem:[#allocation2]] %s9
  $region1: #{tpu_custom_call.1} parent=0
    #allocation3 [shape = 'u8[16384]{0}', space=vmem, size = 0x4000, scoped, tag = 'input window, operand 1, single buffered']
    #allocation4 [shape = 's32[1]{0}', space=sflag, size = 0x4, scoped, tag = 'scoped memory for tpu_custom_call.1']
    #allocation5 [shape = 's32[1]{0}', space=sflag, size = 0x4, scoped, tag = 'scoped memory for tpu_custom_call.1']
    #allocation6 [shape = 'u8[8192]{0}', space=vmem, size = 0x2000, scoped, tag = 'input window, operand 2, single buffered']
    #allocation7 [shape = 's32[1]{0}', space=sflag, size = 0x4, scoped, tag = 'scoped memory for tpu_custom_call.1']
    #allocation8 [shape = 'u8[16384]{0}', space=vmem, size = 0x4000, scoped, tag = 'input window, operand 3, single buffered']
    #allocation9 [shape = 'u8[65536]{0}', space=vmem, size = 0x10000, scoped, tag = 'input window, operand 5, single buffered']
    #allocation10 [shape = 's32[1]{0}', space=sflag, size = 0x4, scoped, tag = 'scoped memory for tpu_custom_call.1']
    #allocation11 [shape = 'u8[1024]{0}', space=vmem, size = 0x400, scoped, tag = 'output window, operand 0, single buffered']
    %16 = vsyncpa [#allocation4], 0
    %17 = vsyncpa [#allocation7], 0
    %18 = vsyncpa [#allocation10], 0
    %19 = vsyncpa [#allocation5], 0
    // Predicated region
    $region2: #{tpu_custom_call.1} parent=1 // pred_check
      _
    $region3: #{tpu_custom_call.1} parent=1 // pred_check_branch
      %21 = sbr.rel (0) target = $region5
    $region4: #{tpu_custom_call.1} parent=1 // pred_region
      _
    $region5: #{tpu_custom_call.1} parent=1 // pred_fallthru
      _
    // Predicated region
    $region6: #{tpu_custom_call.1} parent=1 // pred_check
      _
    $region7: #{tpu_custom_call.1} parent=1 // pred_check_branch
      %23 = sbr.rel (0) target = $region9
    $region8: #{tpu_custom_call.1} parent=1 // pred_region
      %s25 = ssub.s32 512, 512
      %26 = vsyncadd [#allocation4], %s25
      %s27 = sshll.u32 [#allocation3], 4
      %s28 = int_to_ptr.vmem [resolvable:$true] %s27
      %33 = dma.hbm_to_vmem [thread:$0]  %s1, 512, %s28, [#allocation4], 128, 128, 8
    $region9: #{tpu_custom_call.1} parent=1 // pred_fallthru
      _
    // Predicated region
    $region10: #{tpu_custom_call.1} parent=1 // pred_check
      _
    $region11: #{tpu_custom_call.1} parent=1 // pred_check_branch
      %35 = sbr.rel (0) target = $region13
    $region12: #{tpu_custom_call.1} parent=1 // pred_region
      %s37 = ssub.s32 256, 256
      %38 = vsyncadd [#allocation7], %s37
      %s39 = sshll.u32 [#allocation6], 4
      %s40 = int_to_ptr.vmem [resolvable:$true] %s39
      %45 = dma.hbm_to_vmem [thread:$0]  %s2, 256, %s40, [#allocation7], 128, 128, 8
    $region13: #{tpu_custom_call.1} parent=1 // pred_fallthru
      _
    // Predicated region
    $region14: #{tpu_custom_call.1} parent=1 // pred_check
      _
    $region15: #{tpu_custom_call.1} parent=1 // pred_check_branch
      %47 = sbr.rel (0) target = $region17
    $region16: #{tpu_custom_call.1} parent=1 // pred_region
      %s49 = ssub.s32 512, 512
      %50 = vsyncadd [#allocation7], %s49
      %s51 = sshll.u32 [#allocation8], 4
      %s52 = int_to_ptr.vmem [resolvable:$true] %s51
      %57 = dma.hbm_to_vmem [thread:$0]  %s3, 512, %s52, [#allocation7], 64, 64, 4
    $region17: #{tpu_custom_call.1} parent=1 // pred_fallthru
      _
    // Predicated region
    $region18: #{tpu_custom_call.1} parent=1 // pred_check
      _
    $region19: #{tpu_custom_call.1} parent=1 // pred_check_branch
      %59 = sbr.rel (0) target = $region21
    $region20: #{tpu_custom_call.1} parent=1 // pred_region
      _
    $region21: #{tpu_custom_call.1} parent=1 // pred_fallthru
      _
    // Predicated region
    $region22: #{tpu_custom_call.1} parent=1 // pred_check
      _
    $region23: #{tpu_custom_call.1} parent=1 // pred_check_branch
      %61 = sbr.rel (0) target = $region25
    $region24: #{tpu_custom_call.1} parent=1 // pred_region
      %s63 = ssub.s32 2048, 2048
      %64 = vsyncadd [#allocation10], %s63
      %s65 = sshll.u32 [#allocation9], 4
      %s66 = int_to_ptr.vmem [resolvable:$true] %s65
      %71 = dma.hbm_to_vmem [thread:$0]  %s5, 2048, %s66, [#allocation10], 128, 128, 8
    $region25: #{tpu_custom_call.1} parent=1 // pred_fallthru
      _
    // Predicated region
    $region26: #{tpu_custom_call.1} parent=1 // pred_check
      _
    $region27: #{tpu_custom_call.1} parent=1 // pred_check_branch
      %73 = sbr.rel (0) target = $region29
    $region28: #{tpu_custom_call.1} parent=1 // pred_region
      _
    $region29: #{tpu_custom_call.1} parent=1 // pred_fallthru
      _
    // Predicated region
    $region30: #{tpu_custom_call.1} parent=1 // pred_check
      _
    $region31: #{tpu_custom_call.1} parent=1 // pred_check_branch
      %75 = sbr.rel (0) target = $region33
    $region32: #{tpu_custom_call.1} parent=1 // pred_region
      _
    $region33: #{tpu_custom_call.1} parent=1 // pred_fallthru
      _
    // Predicated region
    $region34: #{tpu_custom_call.1} parent=1 // pred_check
      _
    $region35: #{tpu_custom_call.1} parent=1 // pred_check_branch
      %77 = sbr.rel (0) target = $region37
    $region36: #{tpu_custom_call.1} parent=1 // pred_region
      _
    $region37: #{tpu_custom_call.1} parent=1 // pred_fallthru
      _
    // Predicated region
    $region38: #{tpu_custom_call.1} parent=1 // pred_check
      _
    $region39: #{tpu_custom_call.1} parent=1 // pred_check_branch
      %79 = sbr.rel (0) target = $region41
    $region40: #{tpu_custom_call.1} parent=1 // pred_region
      _
    $region41: #{tpu_custom_call.1} parent=1 // pred_fallthru
      _
    // Predicated region
    $region42: #{tpu_custom_call.1} parent=1 // pred_check
      _
    $region43: #{tpu_custom_call.1} parent=1 // pred_check_branch
      %81 = sbr.rel (0) target = $region45
    $region44: #{tpu_custom_call.1} parent=1 // pred_region
      %82 = dma.done [#allocation4], 512
    $region45: #{tpu_custom_call.1} parent=1 // pred_fallthru
      _
    // Predicated region
    $region46: #{tpu_custom_call.1} parent=1 // pred_check
      _
    $region47: #{tpu_custom_call.1} parent=1 // pred_check_branch
      %84 = sbr.rel (0) target = $region49
    $region48: #{tpu_custom_call.1} parent=1 // pred_region
      %85 = dma.done [#allocation7], 256
    $region49: #{tpu_custom_call.1} parent=1 // pred_fallthru
      _
    // Predicated region
    $region50: #{tpu_custom_call.1} parent=1 // pred_check
      _
    $region51: #{tpu_custom_call.1} parent=1 // pred_check_branch
      %87 = sbr.rel (0) target = $region53
    $region52: #{tpu_custom_call.1} parent=1 // pred_region
      %88 = dma.done [#allocation7], 512
    $region53: #{tpu_custom_call.1} parent=1 // pred_fallthru
      _
    // Predicated region
    $region54: #{tpu_custom_call.1} parent=1 // pred_check
      _
    $region55: #{tpu_custom_call.1} parent=1 // pred_check_branch
      %90 = sbr.rel (0) target = $region57
    $region56: #{tpu_custom_call.1} parent=1 // pred_region
      %91 = dma.done [#allocation10], 2048
    $region57: #{tpu_custom_call.1} parent=1 // pred_fallthru
      _
    %v93 = vld [vmem:[#allocation6] sm:$0xff]
    %v94 = vld [vmem:[#allocation6 + $0x8] sm:$0xff]
    %v95 = vld [vmem:[%s0] sm:$0xff]
    %v96 = vld [vmem:[%s0 + $0x8] sm:$0xff]
    %v97 = vld [vmem:[%s0 + $0x10] sm:$0xff]
    %v98 = vld [vmem:[%s0 + $0x18] sm:$0xff]
    %v99 = vld [vmem:[%s0 + $0x20] sm:$0xff]
    %v100 = vld [vmem:[%s0 + $0x28] sm:$0xff]
    %v101 = vld [vmem:[%s0 + $0x30] sm:$0xff]
    %v102 = vld [vmem:[%s0 + $0x38] sm:$0xff]
    %v103 = vld [vmem:[%s0 + $0x40] sm:$0xff]
    %v104 = vld [vmem:[%s0 + $0x48] sm:$0xff]
    %v105 = vld [vmem:[%s0 + $0x50] sm:$0xff]
    %v106 = vld [vmem:[%s0 + $0x58] sm:$0xff]
    %v107 = vld [vmem:[%s0 + $0x60] sm:$0xff]
    %v108 = vld [vmem:[%s0 + $0x68] sm:$0xff]
    %v109 = vld [vmem:[%s0 + $0x70] sm:$0xff]
    %v110 = vld [vmem:[%s0 + $0x78] sm:$0xff]
    %v111 = vld [vmem:[%s0 + $0x80] sm:$0xff]
    %v112 = vld [vmem:[%s0 + $0x88] sm:$0xff]
    %v113 = vld [vmem:[%s0 + $0x90] sm:$0xff]
    %v114 = vld [vmem:[%s0 + $0x98] sm:$0xff]
    %v115 = vld [vmem:[%s0 + $0xa0] sm:$0xff]
    %v116 = vld [vmem:[%s0 + $0xa8] sm:$0xff]
    %v117 = vpack.c.bf16 %v96, %v95
    %v118 = vpack.c.bf16 %v98, %v97
    %v119 = vpack.c.bf16 %v100, %v99
    %v120 = vpack.c.bf16 %v102, %v101
    %v121 = vpack.c.bf16 %v104, %v103
    %v122 = vpack.c.bf16 %v106, %v105
    %v123 = vpack.c.bf16 %v108, %v107
    %v124 = vpack.c.bf16 %v110, %v109
    %v125 = vpack.c.bf16 %v112, %v111
    %v126 = vpack.c.bf16 %v114, %v113
    %v127 = vpack.c.bf16 %v116, %v115
    %v130 = vunpack.c.l.b16 %v93
    %v131 = vunpack.c.h.b16 %v93
    %v132 = vunpack.c.l.b16 %v94
    %v133 = vunpack.c.h.b16 %v94
    %v134 = vpack.c.b16 %v132, %v130
    %v135 = vpack.c.b16 %v133, %v131
    %vm137 = vcmask 392192
    %v139 = vsel %vm137, %v135, 0
    %141 = vmatprep.subr.bf16.mxu0 0
    %142 = vmatpush1.bf16.msra.mxu0 %v117
    %143 = vmatprep.subr.bf16.mxu0 0
    %144 = vmatpush1.bf16.msra.mxu0 %v118
    %145 = vmatprep.subr.bf16.mxu0 0
    %146 = vmatpush1.bf16.msra.mxu0 %v119
    %147 = vmatprep.subr.bf16.mxu0 0
    %148 = vmatpush1.bf16.msra.mxu0 %v120
    %149 = vmatprep.subr.bf16.mxu0 0
    %150 = vmatpush1.bf16.msra.mxu0 %v121
    %151 = vmatprep.subr.bf16.mxu0 0
    %152 = vmatpush1.bf16.msra.mxu0 %v122
    %153 = vmatprep.subr.bf16.mxu0 0
    %154 = vmatpush1.bf16.msra.mxu0 %v123
    %155 = vmatprep.subr.bf16.mxu0 0
    %156 = vmatpush1.bf16.msra.mxu0 %v124
    %157 = vmatprep.subr.bf16.mxu0 0
    %158 = vmatpush1.bf16.msra.mxu0 %v125
    %159 = vmatprep.subr.bf16.mxu0 0
    %160 = vmatpush1.bf16.msra.mxu0 %v126
    %161 = vmatprep.subr.bf16.mxu0 0
    %162 = vmatpush1.bf16.msra.mxu0 %v127
    %163 = vmatprep.subr.bf16.mxu0 0
    %164 = vmatpush1.bf16.msra.mxu0 0
    %165 = vmatprep.subr.bf16.mxu0 0
    %166 = vmatpush1.bf16.msra.mxu0 0
    %167 = vmatprep.subr.bf16.mxu0 0
    %168 = vmatpush1.bf16.msra.mxu0 0
    %169 = vmatprep.subr.bf16.mxu0 0
    %170 = vmatpush1.bf16.msra.mxu0 0
    %171 = vmatprep.subr.bf16.mxu0 0
    %172 = vmatpush1.bf16.msra.mxu0 0
    %173 = vmatprep.mubr.bf16.mxu0 %v139
    %174 = vmatmul.mubr.bf16.gmra.mrb[0].mxu0 %v134
    %v175 = vpop.f32.mrb[0].mxu0
    %v176 = vadd.f32 0.0, %v175
    %v177 = vpop.f32.mrb[0].mxu0
    %v178 = vpop.f32.mrb[0].mxu0
    %v179 = vadd.f32 0.0, %v178
    %v180 = vpop.f32.mrb[0].mxu0
    %181 = vdwg.mxu0
    %v182 = vld [vmem:[#allocation3] sm:$0xff]
    %v183 = vld [vmem:[#allocation3 + $0x8] sm:$0xff]
    %v184 = vld [vmem:[#allocation3 + $0x10] sm:$0xff]
    %v185 = vld [vmem:[#allocation3 + $0x18] sm:$0xff]
    %v186 = vpack.c.bf16 %v179, %v176
    %v187 = vpack.c.bf16 %v183, %v182
    %v188 = vpack.c.bf16 %v185, %v184
    %v189 = vld [vmem:[%s8] sm:$0x1]
    %v190 = vld [vmem:[%s8 + $0x1] sm:$0x1]
    %s191 = scalar_lea.vmem %s8, 2
    %v192 = vld [vmem:[%s191] ss:$4 sm:$0x3]
    %s193 = scalar_lea.vmem %s8, 3
    %v194 = vld [vmem:[%s193] ss:$4 sm:$0x3]
    %v195 = vld [vmem:[#allocation8] sm:$0xf]
    %v196 = vld [vmem:[#allocation8 + $0x4] sm:$0xf]
    %v197 = vld [vmem:[#allocation8 + $0x8] sm:$0xf]
    %v198 = vld [vmem:[#allocation8 + $0xc] sm:$0xf]
    %v199 = vld [vmem:[#allocation8 + $0x10] sm:$0xf]
    %v200 = vld [vmem:[#allocation8 + $0x14] sm:$0xf]
    %v201 = vld [vmem:[#allocation8 + $0x18] sm:$0xf]
    %v202 = vld [vmem:[#allocation8 + $0x1c] sm:$0xf]
    %v203 = vlaneseq
    %v204 = vshrl.u32 %v203, 7
    %v205 = vsub.s32 0, %v204
    %v206 = vrot.slane %v189, %v205
    %v215 = vunpack.c.l.b16 %v195
    %v216 = vunpack.c.l.b16 %v196
    %v217 = vunpack.c.l.b16 %v197
    %v218 = vunpack.c.l.b16 %v198
    %v219 = vunpack.c.l.b16 %v199
    %v220 = vunpack.c.l.b16 %v200
    %v221 = vunpack.c.l.b16 %v201
    %v222 = vunpack.c.l.b16 %v202
    %v223 = vpack.c.b16 %v216, %v215
    %v224 = vpack.c.b16 %v218, %v217
    %v225 = vpack.c.b16 %v220, %v219
    %v226 = vpack.c.b16 %v222, %v221
    %vm231 = vcmask 523264
    %v233 = vsel %vm231, %v186, 0
    %v236 = vsel %vm231, %v187, 0
    %v239 = vsel %vm231, %v188, 0
    %241 = vmatprep.subr.bf16.mxu0 0
    %242 = vmatpush1.bf16.msra.mxu0 %v223
    %243 = vmatprep.subr.bf16.mxu0 0
    %244 = vmatpush1.bf16.msra.mxu0 %v224
    %245 = vmatprep.subr.bf16.mxu0 0
    %246 = vmatpush1.bf16.msra.mxu0 %v225
    %247 = vmatprep.subr.bf16.mxu0 0
    %248 = vmatpush1.bf16.msra.mxu0 %v226
    %249 = vmatprep.subr.bf16.mxu0 0
    %250 = vmatpush1.bf16.msra.mxu0 0
    %251 = vmatprep.subr.bf16.mxu0 0
    %252 = vmatpush1.bf16.msra.mxu0 0
    %253 = vmatprep.subr.bf16.mxu0 0
    %254 = vmatpush1.bf16.msra.mxu0 0
    %255 = vmatprep.subr.bf16.mxu0 0
    %256 = vmatpush1.bf16.msra.mxu0 0
    %257 = vmatprep.subr.bf16.mxu0 0
    %258 = vmatpush1.bf16.msra.mxu0 0
    %259 = vmatprep.subr.bf16.mxu0 0
    %260 = vmatpush1.bf16.msra.mxu0 0
    %261 = vmatprep.subr.bf16.mxu0 0
    %262 = vmatpush1.bf16.msra.mxu0 0
    %263 = vmatprep.subr.bf16.mxu0 0
    %264 = vmatpush1.bf16.msra.mxu0 0
    %265 = vmatprep.subr.bf16.mxu0 0
    %266 = vmatpush1.bf16.msra.mxu0 0
    %267 = vmatprep.subr.bf16.mxu0 0
    %268 = vmatpush1.bf16.msra.mxu0 0
    %269 = vmatprep.subr.bf16.mxu0 0
    %270 = vmatpush1.bf16.msra.mxu0 0
    %271 = vmatprep.subr.bf16.mxu0 0
    %272 = vmatpush1.bf16.msra.mxu0 0
    %273 = vmatprep.mubr.bf16.mxu0 0
    %274 = vmatmul.mubr.bf16.gmra.mrb[0].mxu0 %v233
    %v275 = vpop.f32.mrb[0].mxu0
    %v276 = vadd.f32 %v206, %v275
    %v277 = vpop.f32.mrb[0].mxu0
    %v278 = vpop.f32.mrb[0].mxu0
    %v279 = vadd.f32 %v206, %v278
    %v280 = vpop.f32.mrb[0].mxu0
    %281 = vmatprep.mubr.bf16.mxu0 0
    %282 = vmatmul.mubr.bf16.gmra.mrb[0].mxu0 %v236
    %v283 = vpop.f32.mrb[0].mxu0
    %v284 = vadd.f32 %v206, %v283
    %v285 = vpop.f32.mrb[0].mxu0
    %v286 = vpop.f32.mrb[0].mxu0
    %v287 = vadd.f32 %v206, %v286
    %v288 = vpop.f32.mrb[0].mxu0
    %289 = vmatprep.mubr.bf16.mxu0 0
    %290 = vmatmul.mubr.bf16.gmra.mrb[0].mxu0 %v239
    %v291 = vpop.f32.mrb[0].mxu0
    %v292 = vadd.f32 %v206, %v291
    %v293 = vpop.f32.mrb[0].mxu0
    %v294 = vpop.f32.mrb[0].mxu0
    %v295 = vadd.f32 %v206, %v294
    %v296 = vpop.f32.mrb[0].mxu0
    %297 = vdwg.mxu0
    %v298 = vmax.f32 %v276, 0.0
    %v299 = vmax.f32 %v279, 0.0
    %v300 = vmax.f32 %v284, 0.0
    %v301 = vmax.f32 %v287, 0.0
    %v302 = vmax.f32 %v292, 0.0
    %v303 = vmax.f32 %v295, 0.0
    %v304 = vpack.c.bf16 %v299, %v298
    %v305 = vpack.c.bf16 %v301, %v300
    %v306 = vpack.c.bf16 %v303, %v302
    %v307 = vld [vmem:[%s4] sm:$0xf]
    %v308 = vld [vmem:[%s4 + $0x4] sm:$0xf]
    %v309 = vld [vmem:[%s4 + $0x8] sm:$0xf]
    %v310 = vld [vmem:[%s4 + $0xc] sm:$0xf]
    %v311 = vld [vmem:[%s4 + $0x10] sm:$0xf]
    %v312 = vld [vmem:[%s4 + $0x14] sm:$0xf]
    %v313 = vld [vmem:[%s4 + $0x18] sm:$0xf]
    %v314 = vld [vmem:[%s4 + $0x1c] sm:$0xf]
    %v315 = vld [vmem:[%s4 + $0x20] sm:$0xf]
    %v316 = vld [vmem:[%s4 + $0x24] sm:$0xf]
    %v317 = vld [vmem:[%s4 + $0x28] sm:$0xf]
    %v318 = vld [vmem:[%s4 + $0x2c] sm:$0xf]
    %v319 = vld [vmem:[%s4 + $0x30] sm:$0xf]
    %v320 = vld [vmem:[%s4 + $0x34] sm:$0xf]
    %v321 = vld [vmem:[%s4 + $0x38] sm:$0xf]
    %v322 = vld [vmem:[%s4 + $0x3c] sm:$0xf]
    %v323 = vlaneseq
    %v324 = vshrl.u32 %v323, 7
    %v325 = vsub.s32 0, %v324
    %v326 = vrot.slane %v190, %v325
    %v343 = vunpack.c.l.b16 %v307
    %v344 = vunpack.c.l.b16 %v308
    %v345 = vunpack.c.l.b16 %v309
    %v346 = vunpack.c.l.b16 %v310
    %v347 = vunpack.c.l.b16 %v311
    %v348 = vunpack.c.l.b16 %v312
    %v349 = vunpack.c.l.b16 %v313
    %v350 = vunpack.c.l.b16 %v314
    %v351 = vunpack.c.l.b16 %v315
    %v352 = vunpack.c.l.b16 %v316
    %v353 = vunpack.c.l.b16 %v317
    %v354 = vunpack.c.l.b16 %v318
    %v355 = vunpack.c.l.b16 %v319
    %v356 = vunpack.c.l.b16 %v320
    %v357 = vunpack.c.l.b16 %v321
    %v358 = vunpack.c.l.b16 %v322
    %v359 = vpack.c.b16 %v344, %v343
    %v360 = vpack.c.b16 %v346, %v345
    %v361 = vpack.c.b16 %v348, %v347
    %v362 = vpack.c.b16 %v350, %v349
    %v363 = vpack.c.b16 %v352, %v351
    %v364 = vpack.c.b16 %v354, %v353
    %v365 = vpack.c.b16 %v356, %v355
    %v366 = vpack.c.b16 %v358, %v357
    %375 = vmatprep.subr.bf16.mxu0 0
    %376 = vmatpush1.bf16.msra.mxu0 %v359
    %377 = vmatprep.subr.bf16.mxu0 0
    %378 = vmatpush1.bf16.msra.mxu0 %v360
    %379 = vmatprep.subr.bf16.mxu0 0
    %380 = vmatpush1.bf16.msra.mxu0 %v361
    %381 = vmatprep.subr.bf16.mxu0 0
    %382 = vmatpush1.bf16.msra.mxu0 %v362
    %383 = vmatprep.subr.bf16.mxu0 0
    %384 = vmatpush1.bf16.msra.mxu0 %v363
    %385 = vmatprep.subr.bf16.mxu0 0
    %386 = vmatpush1.bf16.msra.mxu0 %v364
    %387 = vmatprep.subr.bf16.mxu0 0
    %388 = vmatpush1.bf16.msra.mxu0 %v365
    %389 = vmatprep.subr.bf16.mxu0 0
    %390 = vmatpush1.bf16.msra.mxu0 %v366
    %391 = vmatprep.subr.bf16.mxu0 0
    %392 = vmatpush1.bf16.msra.mxu0 0
    %393 = vmatprep.subr.bf16.mxu0 0
    %394 = vmatpush1.bf16.msra.mxu0 0
    %395 = vmatprep.subr.bf16.mxu0 0
    %396 = vmatpush1.bf16.msra.mxu0 0
    %397 = vmatprep.subr.bf16.mxu0 0
    %398 = vmatpush1.bf16.msra.mxu0 0
    %399 = vmatprep.subr.bf16.mxu0 0
    %400 = vmatpush1.bf16.msra.mxu0 0
    %401 = vmatprep.subr.bf16.mxu0 0
    %402 = vmatpush1.bf16.msra.mxu0 0
    %403 = vmatprep.subr.bf16.mxu0 0
    %404 = vmatpush1.bf16.msra.mxu0 0
    %405 = vmatprep.subr.bf16.mxu0 0
    %406 = vmatpush1.bf16.msra.mxu0 0
    %407 = vmatprep.mubr.bf16.mxu0 0
    %408 = vmatmul.mubr.bf16.gmra.mrb[0].mxu0 %v304
    %v409 = vpop.f32.mrb[0].mxu0
    %v410 = vadd.f32 %v326, %v409
    %v411 = vpop.f32.mrb[0].mxu0
    %v412 = vpop.f32.mrb[0].mxu0
    %v413 = vadd.f32 %v326, %v412
    %v414 = vpop.f32.mrb[0].mxu0
    %415 = vmatprep.mubr.bf16.mxu0 0
    %416 = vmatmul.mubr.bf16.gmra.mrb[0].mxu0 %v305
    %v417 = vpop.f32.mrb[0].mxu0
    %v418 = vadd.f32 %v326, %v417
    %v419 = vpop.f32.mrb[0].mxu0
    %v420 = vpop.f32.mrb[0].mxu0
    %v421 = vadd.f32 %v326, %v420
    %v422 = vpop.f32.mrb[0].mxu0
    %423 = vmatprep.mubr.bf16.mxu0 0
    %424 = vmatmul.mubr.bf16.gmra.mrb[0].mxu0 %v306
    %v425 = vpop.f32.mrb[0].mxu0
    %v426 = vadd.f32 %v326, %v425
    %v427 = vpop.f32.mrb[0].mxu0
    %v428 = vpop.f32.mrb[0].mxu0
    %v429 = vadd.f32 %v326, %v428
    %v430 = vpop.f32.mrb[0].mxu0
    %431 = vdwg.mxu0
    %v432 = vmax.f32 %v410, 0.0
    %v433 = vmax.f32 %v413, 0.0
    %v434 = vmax.f32 %v418, 0.0
    %v435 = vmax.f32 %v421, 0.0
    %v436 = vmax.f32 %v426, 0.0
    %v437 = vmax.f32 %v429, 0.0
    %v438 = vlaneseq
    %v439 = vshrl.u32 %v438, 7
    %v440 = vadd.s32 %v439, 8
    %v441 = vadd.s32 %v439, 16
    %v442 = vadd.s32 %v439, 24
    %v443 = vadd.s32 %v439, 32
    %v444 = vadd.s32 %v439, 40
    %v445 = vlaneseq
    %v446 = vand.u32 %v445, 127
    %vm447 = vcmp.ge.s32.totalorder %v439, 16
    %vm448 = vcmp.ge.s32.totalorder %v440, 16
    %vm449 = vcmp.ge.s32.totalorder %v441, 16
    %vm450 = vcmp.ge.s32.totalorder %v442, 16
    %vm451 = vcmp.ge.s32.totalorder %v443, 16
    %vm452 = vcmp.ge.s32.totalorder %v444, 16
    %vm453 = vcmp.lt.s32.totalorder %v446, 64
    %vm454 = vmxor %vm447, %vm453
    %vm455 = vmxor %vm448, %vm453
    %vm456 = vmxor %vm449, %vm453
    %vm457 = vmxor %vm450, %vm453
    %vm458 = vmxor %vm451, %vm453
    %vm459 = vmxor %vm452, %vm453
    %v460 = vsel %vm454, %v432, 0.0
    %v461 = vsel %vm455, %v433, 0.0
    %v462 = vsel %vm456, %v434, 0.0
    %v463 = vsel %vm457, %v435, 0.0
    %v464 = vsel %vm458, %v436, 0.0
    %v465 = vsel %vm459, %v437, 0.0
    %v466 = vpack.c.bf16 %v461, %v460
    %v467 = vpack.c.bf16 %v463, %v462
    %v468 = vpack.c.bf16 %v465, %v464
    %v469 = vld [vmem:[#allocation9] sm:$0xff]
    %v470 = vld [vmem:[#allocation9 + $0x8] sm:$0xff]
    %v471 = vld [vmem:[#allocation9 + $0x10] sm:$0xff]
    %v472 = vld [vmem:[#allocation9 + $0x18] sm:$0xff]
    %v473 = vld [vmem:[#allocation9 + $0x20] sm:$0xff]
    %v474 = vld [vmem:[#allocation9 + $0x28] sm:$0xff]
    %v475 = vld [vmem:[#allocation9 + $0x30] sm:$0xff]
    %v476 = vld [vmem:[#allocation9 + $0x38] sm:$0xff]
    %v477 = vld [vmem:[#allocation9 + $0x40] sm:$0xff]
    %v478 = vld [vmem:[#allocation9 + $0x48] sm:$0xff]
    %v479 = vld [vmem:[#allocation9 + $0x50] sm:$0xff]
    %v480 = vld [vmem:[#allocation9 + $0x58] sm:$0xff]
    %v481 = vld [vmem:[#allocation9 + $0x60] sm:$0xff]
    %v482 = vld [vmem:[#allocation9 + $0x68] sm:$0xff]
    %v483 = vld [vmem:[#allocation9 + $0x70] sm:$0xff]
    %v484 = vld [vmem:[#allocation9 + $0x78] sm:$0xff]
    %v501 = vunpack.c.l.b16 %v469
    %v502 = vunpack.c.h.b16 %v469
    %v503 = vunpack.c.l.b16 %v470
    %v504 = vunpack.c.h.b16 %v470
    %v505 = vunpack.c.l.b16 %v471
    %v506 = vunpack.c.h.b16 %v471
    %v507 = vunpack.c.l.b16 %v472
    %v508 = vunpack.c.h.b16 %v472
    %v509 = vunpack.c.l.b16 %v473
    %v510 = vunpack.c.h.b16 %v473
    %v511 = vunpack.c.l.b16 %v474
    %v512 = vunpack.c.h.b16 %v474
    %v513 = vunpack.c.l.b16 %v475
    %v514 = vunpack.c.h.b16 %v475
    %v515 = vunpack.c.l.b16 %v476
    %v516 = vunpack.c.h.b16 %v476
    %v517 = vunpack.c.l.b16 %v477
    %v518 = vunpack.c.h.b16 %v477
    %v519 = vunpack.c.l.b16 %v478
    %v520 = vunpack.c.h.b16 %v478
    %v521 = vunpack.c.l.b16 %v479
    %v522 = vunpack.c.h.b16 %v479
    %v523 = vunpack.c.l.b16 %v480
    %v524 = vunpack.c.h.b16 %v480
    %v525 = vunpack.c.l.b16 %v481
    %v526 = vunpack.c.h.b16 %v481
    %v527 = vunpack.c.l.b16 %v482
    %v528 = vunpack.c.h.b16 %v482
    %v529 = vunpack.c.l.b16 %v483
    %v530 = vunpack.c.h.b16 %v483
    %v531 = vunpack.c.l.b16 %v484
    %v532 = vunpack.c.h.b16 %v484
    %v533 = vpack.c.b16 %v503, %v501
    %v534 = vpack.c.b16 %v504, %v502
    %v535 = vpack.c.b16 %v507, %v505
    %v536 = vpack.c.b16 %v508, %v506
    %v537 = vpack.c.b16 %v511, %v509
    %v538 = vpack.c.b16 %v512, %v510
    %v539 = vpack.c.b16 %v515, %v513
    %v540 = vpack.c.b16 %v516, %v514
    %v541 = vpack.c.b16 %v519, %v517
    %v542 = vpack.c.b16 %v520, %v518
    %v543 = vpack.c.b16 %v523, %v521
    %v544 = vpack.c.b16 %v524, %v522
    %v545 = vpack.c.b16 %v527, %v525
    %v546 = vpack.c.b16 %v528, %v526
    %v547 = vpack.c.b16 %v531, %v529
    %v548 = vpack.c.b16 %v532, %v530
    %565 = vmatprep.subr.bf16.mxu0 %v534
    %566 = vmatpush1.bf16.msra.mxu0 %v533
    %567 = vmatprep.subr.bf16.mxu0 %v536
    %568 = vmatpush1.bf16.msra.mxu0 %v535
    %569 = vmatprep.subr.bf16.mxu0 %v538
    %570 = vmatpush1.bf16.msra.mxu0 %v537
    %571 = vmatprep.subr.bf16.mxu0 %v540
    %572 = vmatpush1.bf16.msra.mxu0 %v539
    %573 = vmatprep.subr.bf16.mxu0 %v542
    %574 = vmatpush1.bf16.msra.mxu0 %v541
    %575 = vmatprep.subr.bf16.mxu0 %v544
    %576 = vmatpush1.bf16.msra.mxu0 %v543
    %577 = vmatprep.subr.bf16.mxu0 %v546
    %578 = vmatpush1.bf16.msra.mxu0 %v545
    %579 = vmatprep.subr.bf16.mxu0 %v548
    %580 = vmatpush1.bf16.msra.mxu0 %v547
    %581 = vmatprep.subr.bf16.mxu0 0
    %582 = vmatpush1.bf16.msra.mxu0 0
    %583 = vmatprep.subr.bf16.mxu0 0
    %584 = vmatpush1.bf16.msra.mxu0 0
    %585 = vmatprep.subr.bf16.mxu0 0
    %586 = vmatpush1.bf16.msra.mxu0 0
    %587 = vmatprep.subr.bf16.mxu0 0
    %588 = vmatpush1.bf16.msra.mxu0 0
    %589 = vmatprep.subr.bf16.mxu0 0
    %590 = vmatpush1.bf16.msra.mxu0 0
    %591 = vmatprep.subr.bf16.mxu0 0
    %592 = vmatpush1.bf16.msra.mxu0 0
    %593 = vmatprep.subr.bf16.mxu0 0
    %594 = vmatpush1.bf16.msra.mxu0 0
    %595 = vmatprep.subr.bf16.mxu0 0
    %596 = vmatpush1.bf16.msra.mxu0 0
    %597 = vmatprep.mubr.bf16.mxu0 0
    %598 = vmatmul.mubr.bf16.gmra.mrb[0].mxu0 %v466
    %v599 = vpop.f32.mrb[0].mxu0
    %v600 = vadd.f32 0.0, %v599
    %v601 = vpop.f32.mrb[0].mxu0
    %v602 = vadd.f32 0.0, %v601
    %v603 = vpop.f32.mrb[0].mxu0
    %v604 = vadd.f32 0.0, %v603
    %v605 = vpop.f32.mrb[0].mxu0
    %v606 = vadd.f32 0.0, %v605
    %607 = vmatprep.mubr.bf16.mxu0 0
    %608 = vmatmul.mubr.bf16.gmra.mrb[0].mxu0 %v467
    %v609 = vpop.f32.mrb[0].mxu0
    %v610 = vadd.f32 0.0, %v609
    %v611 = vpop.f32.mrb[0].mxu0
    %v612 = vadd.f32 0.0, %v611
    %v613 = vpop.f32.mrb[0].mxu0
    %v614 = vadd.f32 0.0, %v613
    %v615 = vpop.f32.mrb[0].mxu0
    %v616 = vadd.f32 0.0, %v615
    %617 = vmatprep.mubr.bf16.mxu0 0
    %618 = vmatmul.mubr.bf16.gmra.mrb[0].mxu0 %v468
    %v619 = vpop.f32.mrb[0].mxu0
    %v620 = vadd.f32 0.0, %v619
    %v621 = vpop.f32.mrb[0].mxu0
    %v622 = vadd.f32 0.0, %v621
    %v623 = vpop.f32.mrb[0].mxu0
    %v624 = vadd.f32 0.0, %v623
    %v625 = vpop.f32.mrb[0].mxu0
    %v626 = vadd.f32 0.0, %v625
    %627 = vdwg.mxu0
    %v629 = vlaneseq
    %v630 = vshrl.u32 %v629, 7
    %v631 = vsub.s32 0, %v630
    %v632 = vrot.slane %v192, %v631
    %v633 = vlaneseq
    %v634 = vshrl.u32 %v633, 7
    %v635 = vsub.s32 1, %v634
    %v636 = vrot.slane %v192, %v635
    %v639 = vadd.f32 %v610, %v632
    %v640 = vadd.f32 %v612, %v636
    %v641 = vadd.f32 %v614, %v632
    %v642 = vadd.f32 %v616, %v636
    %v643 = vadd.f32 %v620, %v632
    %v644 = vadd.f32 %v622, %v636
    %v645 = vadd.f32 %v624, %v632
    %v646 = vadd.f32 %v626, %v636
    %v649 = vcombine.low %v600, %v602
    %v650 = vcombine.high %v600, %v602
    %v652 = vunpack.c.l.s4 1966171168
    %v653 = vunpack.c.0.s8 %v652
    %v654 = vlaneseq
    %v655 = vshrl.u32 %v654, 7
    %v656 = vsub.s32 %v653, %v655
    %v657 = vrot.slane %v649, %v656
    %v659 = vunpack.c.l.s4 1966171168
    %v660 = vunpack.c.0.s8 %v659
    %v661 = vlaneseq
    %v662 = vshrl.u32 %v661, 7
    %v663 = vsub.s32 %v660, %v662
    %v664 = vrot.slane %v650, %v663
    %v665 = vcombine.high %v657, %v657
    %v666 = vcombine.high %v664, %v664
    %v668 = vunpack.c.l.s4 1966171168
    %v669 = vunpack.c.0.s8 %v668
    %v670 = vlaneseq
    %v671 = vshrl.u32 %v670, 7
    %v672 = vsub.s32 %v669, %v671
    %v673 = vrot.slane %v657, %v672
    %v675 = vunpack.c.l.s4 1966171168
    %v676 = vunpack.c.0.s8 %v675
    %v677 = vlaneseq
    %v678 = vshrl.u32 %v677, 7
    %v679 = vsub.s32 %v676, %v678
    %v680 = vrot.slane %v664, %v679
    %v682 = vunpack.c.l.s4 1966171168
    %v683 = vunpack.c.0.s8 %v682
    %v684 = vlaneseq
    %v685 = vshrl.u32 %v684, 7
    %v686 = vsub.s32 %v683, %v685
    %v687 = vrot.slane %v665, %v686
    %v689 = vunpack.c.l.s4 1966171168
    %v690 = vunpack.c.0.s8 %v689
    %v691 = vlaneseq
    %v692 = vshrl.u32 %v691, 7
    %v693 = vsub.s32 %v690, %v692
    %v694 = vrot.slane %v666, %v693
    %v695 = vcombine.high %v673, %v673
    %v696 = vcombine.high %v680, %v680
    %v697 = vcombine.high %v687, %v687
    %v698 = vcombine.high %v694, %v694
    %v699 = vlaneseq
    %v700 = vshrl.u32 %v699, 7
    %v701 = vsub.s32 0, %v700
    %v702 = vrot.slane %v673, %v701
    %v703 = vlaneseq
    %v704 = vshrl.u32 %v703, 7
    %v705 = vsub.s32 1, %v704
    %v706 = vrot.slane %v673, %v705
    %v707 = vlaneseq
    %v708 = vshrl.u32 %v707, 7
    %v709 = vsub.s32 0, %v708
    %v710 = vrot.slane %v687, %v709
    %v711 = vlaneseq
    %v712 = vshrl.u32 %v711, 7
    %v713 = vsub.s32 1, %v712
    %v714 = vrot.slane %v687, %v713
    %v715 = vlaneseq
    %v716 = vshrl.u32 %v715, 7
    %v717 = vsub.s32 0, %v716
    %v718 = vrot.slane %v695, %v717
    %v719 = vlaneseq
    %v720 = vshrl.u32 %v719, 7
    %v721 = vsub.s32 1, %v720
    %v722 = vrot.slane %v695, %v721
    %v723 = vlaneseq
    %v724 = vshrl.u32 %v723, 7
    %v725 = vsub.s32 0, %v724
    %v726 = vrot.slane %v697, %v725
    %v727 = vlaneseq
    %v728 = vshrl.u32 %v727, 7
    %v729 = vsub.s32 1, %v728
    %v730 = vrot.slane %v697, %v729
    %v731 = vlaneseq
    %v732 = vshrl.u32 %v731, 7
    %v733 = vsub.s32 0, %v732
    %v734 = vrot.slane %v680, %v733
    %v735 = vlaneseq
    %v736 = vshrl.u32 %v735, 7
    %v737 = vsub.s32 1, %v736
    %v738 = vrot.slane %v680, %v737
    %v739 = vlaneseq
    %v740 = vshrl.u32 %v739, 7
    %v741 = vsub.s32 0, %v740
    %v742 = vrot.slane %v694, %v741
    %v743 = vlaneseq
    %v744 = vshrl.u32 %v743, 7
    %v745 = vsub.s32 1, %v744
    %v746 = vrot.slane %v694, %v745
    %v747 = vlaneseq
    %v748 = vshrl.u32 %v747, 7
    %v749 = vsub.s32 0, %v748
    %v750 = vrot.slane %v696, %v749
    %v751 = vlaneseq
    %v752 = vshrl.u32 %v751, 7
    %v753 = vsub.s32 1, %v752
    %v754 = vrot.slane %v696, %v753
    %v755 = vlaneseq
    %v756 = vshrl.u32 %v755, 7
    %v757 = vsub.s32 0, %v756
    %v758 = vrot.slane %v698, %v757
    %v759 = vlaneseq
    %v760 = vshrl.u32 %v759, 7
    %v761 = vsub.s32 1, %v760
    %v762 = vrot.slane %v698, %v761
    %v779 = vadd.f32 %v702, %v639
    %v780 = vadd.f32 %v706, %v640
    %v781 = vadd.f32 %v702, %v641
    %v782 = vadd.f32 %v706, %v642
    %v783 = vadd.f32 %v710, %v639
    %v784 = vadd.f32 %v714, %v640
    %v785 = vadd.f32 %v710, %v641
    %v786 = vadd.f32 %v714, %v642
    %v787 = vadd.f32 %v718, %v639
    %v788 = vadd.f32 %v722, %v640
    %v789 = vadd.f32 %v718, %v641
    %v790 = vadd.f32 %v722, %v642
    %v791 = vadd.f32 %v726, %v639
    %v792 = vadd.f32 %v730, %v640
    %v793 = vadd.f32 %v726, %v641
    %v794 = vadd.f32 %v730, %v642
    %v795 = vadd.f32 %v734, %v639
    %v796 = vadd.f32 %v738, %v640
    %v797 = vadd.f32 %v734, %v641
    %v798 = vadd.f32 %v738, %v642
    %v799 = vadd.f32 %v742, %v639
    %v800 = vadd.f32 %v746, %v640
    %v801 = vadd.f32 %v742, %v641
    %v802 = vadd.f32 %v746, %v642
    %v803 = vadd.f32 %v750, %v639
    %v804 = vadd.f32 %v754, %v640
    %v805 = vadd.f32 %v750, %v641
    %v806 = vadd.f32 %v754, %v642
    %v807 = vadd.f32 %v758, %v639
    %v808 = vadd.f32 %v762, %v640
    %v809 = vadd.f32 %v758, %v641
    %v810 = vadd.f32 %v762, %v642
    %v811 = vmax.f32 %v779, 0.0
    %v812 = vmax.f32 %v780, 0.0
    %v813 = vmax.f32 %v781, 0.0
    %v814 = vmax.f32 %v782, 0.0
    %v815 = vmax.f32 %v783, 0.0
    %v816 = vmax.f32 %v784, 0.0
    %v817 = vmax.f32 %v785, 0.0
    %v818 = vmax.f32 %v786, 0.0
    %v819 = vmax.f32 %v787, 0.0
    %v820 = vmax.f32 %v788, 0.0
    %v821 = vmax.f32 %v789, 0.0
    %v822 = vmax.f32 %v790, 0.0
    %v823 = vmax.f32 %v791, 0.0
    %v824 = vmax.f32 %v792, 0.0
    %v825 = vmax.f32 %v793, 0.0
    %v826 = vmax.f32 %v794, 0.0
    %v827 = vmax.f32 %v795, 0.0
    %v828 = vmax.f32 %v796, 0.0
    %v829 = vmax.f32 %v797, 0.0
    %v830 = vmax.f32 %v798, 0.0
    %v831 = vmax.f32 %v799, 0.0
    %v832 = vmax.f32 %v800, 0.0
    %v833 = vmax.f32 %v801, 0.0
    %v834 = vmax.f32 %v802, 0.0
    %v835 = vmax.f32 %v803, 0.0
    %v836 = vmax.f32 %v804, 0.0
    %v837 = vmax.f32 %v805, 0.0
    %v838 = vmax.f32 %v806, 0.0
    %v839 = vmax.f32 %v807, 0.0
    %v840 = vmax.f32 %v808, 0.0
    %v841 = vmax.f32 %v809, 0.0
    %v842 = vmax.f32 %v810, 0.0
    %v843 = vpack.c.bf16 %v813, %v811
    %v844 = vpack.c.bf16 %v814, %v812
    %v845 = vpack.c.bf16 %v817, %v815
    %v846 = vpack.c.bf16 %v818, %v816
    %v847 = vpack.c.bf16 %v821, %v819
    %v848 = vpack.c.bf16 %v822, %v820
    %v849 = vpack.c.bf16 %v825, %v823
    %v850 = vpack.c.bf16 %v826, %v824
    %v851 = vpack.c.bf16 %v829, %v827
    %v852 = vpack.c.bf16 %v830, %v828
    %v853 = vpack.c.bf16 %v833, %v831
    %v854 = vpack.c.bf16 %v834, %v832
    %v855 = vpack.c.bf16 %v837, %v835
    %v856 = vpack.c.bf16 %v838, %v836
    %v857 = vpack.c.bf16 %v841, %v839
    %v858 = vpack.c.bf16 %v842, %v840
    %v861 = vcombine.low %v604, %v606
    %v862 = vcombine.high %v604, %v606
    %v864 = vunpack.c.l.s4 1966171168
    %v865 = vunpack.c.0.s8 %v864
    %v866 = vlaneseq
    %v867 = vshrl.u32 %v866, 7
    %v868 = vsub.s32 %v865, %v867
    %v869 = vrot.slane %v861, %v868
    %v871 = vunpack.c.l.s4 1966171168
    %v872 = vunpack.c.0.s8 %v871
    %v873 = vlaneseq
    %v874 = vshrl.u32 %v873, 7
    %v875 = vsub.s32 %v872, %v874
    %v876 = vrot.slane %v862, %v875
    %v877 = vcombine.high %v869, %v869
    %v878 = vcombine.high %v876, %v876
    %v880 = vunpack.c.l.s4 1966171168
    %v881 = vunpack.c.0.s8 %v880
    %v882 = vlaneseq
    %v883 = vshrl.u32 %v882, 7
    %v884 = vsub.s32 %v881, %v883
    %v885 = vrot.slane %v869, %v884
    %v887 = vunpack.c.l.s4 1966171168
    %v888 = vunpack.c.0.s8 %v887
    %v889 = vlaneseq
    %v890 = vshrl.u32 %v889, 7
    %v891 = vsub.s32 %v888, %v890
    %v892 = vrot.slane %v876, %v891
    %v894 = vunpack.c.l.s4 1966171168
    %v895 = vunpack.c.0.s8 %v894
    %v896 = vlaneseq
    %v897 = vshrl.u32 %v896, 7
    %v898 = vsub.s32 %v895, %v897
    %v899 = vrot.slane %v877, %v898
    %v901 = vunpack.c.l.s4 1966171168
    %v902 = vunpack.c.0.s8 %v901
    %v903 = vlaneseq
    %v904 = vshrl.u32 %v903, 7
    %v905 = vsub.s32 %v902, %v904
    %v906 = vrot.slane %v878, %v905
    %v907 = vcombine.high %v885, %v885
    %v908 = vcombine.high %v892, %v892
    %v909 = vcombine.high %v899, %v899
    %v910 = vcombine.high %v906, %v906
    %v911 = vlaneseq
    %v912 = vshrl.u32 %v911, 7
    %v913 = vsub.s32 0, %v912
    %v914 = vrot.slane %v885, %v913
    %v915 = vlaneseq
    %v916 = vshrl.u32 %v915, 7
    %v917 = vsub.s32 1, %v916
    %v918 = vrot.slane %v885, %v917
    %v919 = vlaneseq
    %v920 = vshrl.u32 %v919, 7
    %v921 = vsub.s32 0, %v920
    %v922 = vrot.slane %v899, %v921
    %v923 = vlaneseq
    %v924 = vshrl.u32 %v923, 7
    %v925 = vsub.s32 1, %v924
    %v926 = vrot.slane %v899, %v925
    %v927 = vlaneseq
    %v928 = vshrl.u32 %v927, 7
    %v929 = vsub.s32 0, %v928
    %v930 = vrot.slane %v907, %v929
    %v931 = vlaneseq
    %v932 = vshrl.u32 %v931, 7
    %v933 = vsub.s32 1, %v932
    %v934 = vrot.slane %v907, %v933
    %v935 = vlaneseq
    %v936 = vshrl.u32 %v935, 7
    %v937 = vsub.s32 0, %v936
    %v938 = vrot.slane %v909, %v937
    %v939 = vlaneseq
    %v940 = vshrl.u32 %v939, 7
    %v941 = vsub.s32 1, %v940
    %v942 = vrot.slane %v909, %v941
    %v943 = vlaneseq
    %v944 = vshrl.u32 %v943, 7
    %v945 = vsub.s32 0, %v944
    %v946 = vrot.slane %v892, %v945
    %v947 = vlaneseq
    %v948 = vshrl.u32 %v947, 7
    %v949 = vsub.s32 1, %v948
    %v950 = vrot.slane %v892, %v949
    %v951 = vlaneseq
    %v952 = vshrl.u32 %v951, 7
    %v953 = vsub.s32 0, %v952
    %v954 = vrot.slane %v906, %v953
    %v955 = vlaneseq
    %v956 = vshrl.u32 %v955, 7
    %v957 = vsub.s32 1, %v956
    %v958 = vrot.slane %v906, %v957
    %v959 = vlaneseq
    %v960 = vshrl.u32 %v959, 7
    %v961 = vsub.s32 0, %v960
    %v962 = vrot.slane %v908, %v961
    %v963 = vlaneseq
    %v964 = vshrl.u32 %v963, 7
    %v965 = vsub.s32 1, %v964
    %v966 = vrot.slane %v908, %v965
    %v967 = vlaneseq
    %v968 = vshrl.u32 %v967, 7
    %v969 = vsub.s32 0, %v968
    %v970 = vrot.slane %v910, %v969
    %v971 = vlaneseq
    %v972 = vshrl.u32 %v971, 7
    %v973 = vsub.s32 1, %v972
    %v974 = vrot.slane %v910, %v973
    %v991 = vadd.f32 %v914, %v643
    %v992 = vadd.f32 %v918, %v644
    %v993 = vadd.f32 %v914, %v645
    %v994 = vadd.f32 %v918, %v646
    %v995 = vadd.f32 %v922, %v643
    %v996 = vadd.f32 %v926, %v644
    %v997 = vadd.f32 %v922, %v645
    %v998 = vadd.f32 %v926, %v646
    %v999 = vadd.f32 %v930, %v643
    %v1000 = vadd.f32 %v934, %v644
    %v1001 = vadd.f32 %v930, %v645
    %v1002 = vadd.f32 %v934, %v646
    %v1003 = vadd.f32 %v938, %v643
    %v1004 = vadd.f32 %v942, %v644
    %v1005 = vadd.f32 %v938, %v645
    %v1006 = vadd.f32 %v942, %v646
    %v1007 = vadd.f32 %v946, %v643
    %v1008 = vadd.f32 %v950, %v644
    %v1009 = vadd.f32 %v946, %v645
    %v1010 = vadd.f32 %v950, %v646
    %v1011 = vadd.f32 %v954, %v643
    %v1012 = vadd.f32 %v958, %v644
    %v1013 = vadd.f32 %v954, %v645
    %v1014 = vadd.f32 %v958, %v646
    %v1015 = vadd.f32 %v962, %v643
    %v1016 = vadd.f32 %v966, %v644
    %v1017 = vadd.f32 %v962, %v645
    %v1018 = vadd.f32 %v966, %v646
    %v1019 = vadd.f32 %v970, %v643
    %v1020 = vadd.f32 %v974, %v644
    %v1021 = vadd.f32 %v970, %v645
    %v1022 = vadd.f32 %v974, %v646
    %v1023 = vmax.f32 %v991, 0.0
    %v1024 = vmax.f32 %v992, 0.0
    %v1025 = vmax.f32 %v993, 0.0
    %v1026 = vmax.f32 %v994, 0.0
    %v1027 = vmax.f32 %v995, 0.0
    %v1028 = vmax.f32 %v996, 0.0
    %v1029 = vmax.f32 %v997, 0.0
    %v1030 = vmax.f32 %v998, 0.0
    %v1031 = vmax.f32 %v999, 0.0
    %v1032 = vmax.f32 %v1000, 0.0
    %v1033 = vmax.f32 %v1001, 0.0
    %v1034 = vmax.f32 %v1002, 0.0
    %v1035 = vmax.f32 %v1003, 0.0
    %v1036 = vmax.f32 %v1004, 0.0
    %v1037 = vmax.f32 %v1005, 0.0
    %v1038 = vmax.f32 %v1006, 0.0
    %v1039 = vmax.f32 %v1007, 0.0
    %v1040 = vmax.f32 %v1008, 0.0
    %v1041 = vmax.f32 %v1009, 0.0
    %v1042 = vmax.f32 %v1010, 0.0
    %v1043 = vmax.f32 %v1011, 0.0
    %v1044 = vmax.f32 %v1012, 0.0
    %v1045 = vmax.f32 %v1013, 0.0
    %v1046 = vmax.f32 %v1014, 0.0
    %v1047 = vmax.f32 %v1015, 0.0
    %v1048 = vmax.f32 %v1016, 0.0
    %v1049 = vmax.f32 %v1017, 0.0
    %v1050 = vmax.f32 %v1018, 0.0
    %v1051 = vmax.f32 %v1019, 0.0
    %v1052 = vmax.f32 %v1020, 0.0
    %v1053 = vmax.f32 %v1021, 0.0
    %v1054 = vmax.f32 %v1022, 0.0
    %v1055 = vpack.c.bf16 %v1025, %v1023
    %v1056 = vpack.c.bf16 %v1026, %v1024
    %v1057 = vpack.c.bf16 %v1029, %v1027
    %v1058 = vpack.c.bf16 %v1030, %v1028
    %v1059 = vpack.c.bf16 %v1033, %v1031
    %v1060 = vpack.c.bf16 %v1034, %v1032
    %v1061 = vpack.c.bf16 %v1037, %v1035
    %v1062 = vpack.c.bf16 %v1038, %v1036
    %v1063 = vpack.c.bf16 %v1041, %v1039
    %v1064 = vpack.c.bf16 %v1042, %v1040
    %v1065 = vpack.c.bf16 %v1045, %v1043
    %v1066 = vpack.c.bf16 %v1046, %v1044
    %v1067 = vpack.c.bf16 %v1049, %v1047
    %v1068 = vpack.c.bf16 %v1050, %v1048
    %v1069 = vpack.c.bf16 %v1053, %v1051
    %v1070 = vpack.c.bf16 %v1054, %v1052
    %v1071 = vld [vmem:[%s6] sm:$0xff]
    %v1072 = vld [vmem:[%s6 + $0x8] sm:$0xff]
    %v1073 = vld [vmem:[%s6 + $0x10] sm:$0xff]
    %v1074 = vld [vmem:[%s6 + $0x18] sm:$0xff]
    %v1075 = vld [vmem:[%s6 + $0x20] sm:$0xff]
    %v1076 = vld [vmem:[%s6 + $0x28] sm:$0xff]
    %v1077 = vld [vmem:[%s6 + $0x30] sm:$0xff]
    %v1078 = vld [vmem:[%s6 + $0x38] sm:$0xff]
    %v1079 = vld [vmem:[%s6 + $0x40] sm:$0xff]
    %v1080 = vld [vmem:[%s6 + $0x48] sm:$0xff]
    %v1081 = vld [vmem:[%s6 + $0x50] sm:$0xff]
    %v1082 = vld [vmem:[%s6 + $0x58] sm:$0xff]
    %v1083 = vld [vmem:[%s6 + $0x60] sm:$0xff]
    %v1084 = vld [vmem:[%s6 + $0x68] sm:$0xff]
    %v1085 = vld [vmem:[%s6 + $0x70] sm:$0xff]
    %v1086 = vld [vmem:[%s6 + $0x78] sm:$0xff]
    %v1087 = vld [vmem:[%s6 + $0x80] sm:$0xff]
    %v1088 = vld [vmem:[%s6 + $0x88] sm:$0xff]
    %v1089 = vld [vmem:[%s6 + $0x90] sm:$0xff]
    %v1090 = vld [vmem:[%s6 + $0x98] sm:$0xff]
    %v1091 = vld [vmem:[%s6 + $0xa0] sm:$0xff]
    %v1092 = vld [vmem:[%s6 + $0xa8] sm:$0xff]
    %v1093 = vld [vmem:[%s6 + $0xb0] sm:$0xff]
    %v1094 = vld [vmem:[%s6 + $0xb8] sm:$0xff]
    %v1095 = vld [vmem:[%s6 + $0xc0] sm:$0xff]
    %v1096 = vld [vmem:[%s6 + $0xc8] sm:$0xff]
    %v1097 = vld [vmem:[%s6 + $0xd0] sm:$0xff]
    %v1098 = vld [vmem:[%s6 + $0xd8] sm:$0xff]
    %v1099 = vld [vmem:[%s6 + $0xe0] sm:$0xff]
    %v1100 = vld [vmem:[%s6 + $0xe8] sm:$0xff]
    %v1101 = vld [vmem:[%s6 + $0xf0] sm:$0xff]
    %v1102 = vld [vmem:[%s6 + $0xf8] sm:$0xff]
    %v1104 = vlaneseq
    %v1105 = vshrl.u32 %v1104, 7
    %v1106 = vsub.s32 0, %v1105
    %v1107 = vrot.slane %v194, %v1106
    %v1108 = vlaneseq
    %v1109 = vshrl.u32 %v1108, 7
    %v1110 = vsub.s32 1, %v1109
    %v1111 = vrot.slane %v194, %v1110
    %v1146 = vunpack.c.l.b16 %v1071
    %v1147 = vunpack.c.h.b16 %v1071
    %v1148 = vunpack.c.l.b16 %v1072
    %v1149 = vunpack.c.h.b16 %v1072
    %v1150 = vunpack.c.l.b16 %v1073
    %v1151 = vunpack.c.h.b16 %v1073
    %v1152 = vunpack.c.l.b16 %v1074
    %v1153 = vunpack.c.h.b16 %v1074
    %v1154 = vunpack.c.l.b16 %v1075
    %v1155 = vunpack.c.h.b16 %v1075
    %v1156 = vunpack.c.l.b16 %v1076
    %v1157 = vunpack.c.h.b16 %v1076
    %v1158 = vunpack.c.l.b16 %v1077
    %v1159 = vunpack.c.h.b16 %v1077
    %v1160 = vunpack.c.l.b16 %v1078
    %v1161 = vunpack.c.h.b16 %v1078
    %v1162 = vunpack.c.l.b16 %v1079
    %v1163 = vunpack.c.h.b16 %v1079
    %v1164 = vunpack.c.l.b16 %v1080
    %v1165 = vunpack.c.h.b16 %v1080
    %v1166 = vunpack.c.l.b16 %v1081
    %v1167 = vunpack.c.h.b16 %v1081
    %v1168 = vunpack.c.l.b16 %v1082
    %v1169 = vunpack.c.h.b16 %v1082
    %v1170 = vunpack.c.l.b16 %v1083
    %v1171 = vunpack.c.h.b16 %v1083
    %v1172 = vunpack.c.l.b16 %v1084
    %v1173 = vunpack.c.h.b16 %v1084
    %v1174 = vunpack.c.l.b16 %v1085
    %v1175 = vunpack.c.h.b16 %v1085
    %v1176 = vunpack.c.l.b16 %v1086
    %v1177 = vunpack.c.h.b16 %v1086
    %v1178 = vunpack.c.l.b16 %v1087
    %v1179 = vunpack.c.h.b16 %v1087
    %v1180 = vunpack.c.l.b16 %v1088
    %v1181 = vunpack.c.h.b16 %v1088
    %v1182 = vunpack.c.l.b16 %v1089
    %v1183 = vunpack.c.h.b16 %v1089
    %v1184 = vunpack.c.l.b16 %v1090
    %v1185 = vunpack.c.h.b16 %v1090
    %v1186 = vunpack.c.l.b16 %v1091
    %v1187 = vunpack.c.h.b16 %v1091
    %v1188 = vunpack.c.l.b16 %v1092
    %v1189 = vunpack.c.h.b16 %v1092
    %v1190 = vunpack.c.l.b16 %v1093
    %v1191 = vunpack.c.h.b16 %v1093
    %v1192 = vunpack.c.l.b16 %v1094
    %v1193 = vunpack.c.h.b16 %v1094
    %v1194 = vunpack.c.l.b16 %v1095
    %v1195 = vunpack.c.h.b16 %v1095
    %v1196 = vunpack.c.l.b16 %v1096
    %v1197 = vunpack.c.h.b16 %v1096
    %v1198 = vunpack.c.l.b16 %v1097
    %v1199 = vunpack.c.h.b16 %v1097
    %v1200 = vunpack.c.l.b16 %v1098
    %v1201 = vunpack.c.h.b16 %v1098
    %v1202 = vunpack.c.l.b16 %v1099
    %v1203 = vunpack.c.h.b16 %v1099
    %v1204 = vunpack.c.l.b16 %v1100
    %v1205 = vunpack.c.h.b16 %v1100
    %v1206 = vunpack.c.l.b16 %v1101
    %v1207 = vunpack.c.h.b16 %v1101
    %v1208 = vunpack.c.l.b16 %v1102
    %v1209 = vunpack.c.h.b16 %v1102
    %v1210 = vpack.c.b16 %v1148, %v1146
    %v1211 = vpack.c.b16 %v1149, %v1147
    %v1212 = vpack.c.b16 %v1152, %v1150
    %v1213 = vpack.c.b16 %v1153, %v1151
    %v1214 = vpack.c.b16 %v1156, %v1154
    %v1215 = vpack.c.b16 %v1157, %v1155
    %v1216 = vpack.c.b16 %v1160, %v1158
    %v1217 = vpack.c.b16 %v1161, %v1159
    %v1218 = vpack.c.b16 %v1164, %v1162
    %v1219 = vpack.c.b16 %v1165, %v1163
    %v1220 = vpack.c.b16 %v1168, %v1166
    %v1221 = vpack.c.b16 %v1169, %v1167
    %v1222 = vpack.c.b16 %v1172, %v1170
    %v1223 = vpack.c.b16 %v1173, %v1171
    %v1224 = vpack.c.b16 %v1176, %v1174
    %v1225 = vpack.c.b16 %v1177, %v1175
    %v1226 = vpack.c.b16 %v1180, %v1178
    %v1227 = vpack.c.b16 %v1181, %v1179
    %v1228 = vpack.c.b16 %v1184, %v1182
    %v1229 = vpack.c.b16 %v1185, %v1183
    %v1230 = vpack.c.b16 %v1188, %v1186
    %v1231 = vpack.c.b16 %v1189, %v1187
    %v1232 = vpack.c.b16 %v1192, %v1190
    %v1233 = vpack.c.b16 %v1193, %v1191
    %v1234 = vpack.c.b16 %v1196, %v1194
    %v1235 = vpack.c.b16 %v1197, %v1195
    %v1236 = vpack.c.b16 %v1200, %v1198
    %v1237 = vpack.c.b16 %v1201, %v1199
    %v1238 = vpack.c.b16 %v1204, %v1202
    %v1239 = vpack.c.b16 %v1205, %v1203
    %v1240 = vpack.c.b16 %v1208, %v1206
    %v1241 = vpack.c.b16 %v1209, %v1207
    %1274 = vmatprep.subr.bf16.mxu0 %v1211
    %1275 = vmatpush1.bf16.msra.mxu0 %v1210
    %1276 = vmatprep.subr.bf16.mxu0 %v1213
    %1277 = vmatpush1.bf16.msra.mxu0 %v1212
    %1278 = vmatprep.subr.bf16.mxu0 %v1215
    %1279 = vmatpush1.bf16.msra.mxu0 %v1214
    %1280 = vmatprep.subr.bf16.mxu0 %v1217
    %1281 = vmatpush1.bf16.msra.mxu0 %v1216
    %1282 = vmatprep.subr.bf16.mxu0 %v1219
    %1283 = vmatpush1.bf16.msra.mxu0 %v1218
    %1284 = vmatprep.subr.bf16.mxu0 %v1221
    %1285 = vmatpush1.bf16.msra.mxu0 %v1220
    %1286 = vmatprep.subr.bf16.mxu0 %v1223
    %1287 = vmatpush1.bf16.msra.mxu0 %v1222
    %1288 = vmatprep.subr.bf16.mxu0 %v1225
    %1289 = vmatpush1.bf16.msra.mxu0 %v1224
    %1290 = vmatprep.subr.bf16.mxu0 %v1227
    %1291 = vmatpush1.bf16.msra.mxu0 %v1226
    %1292 = vmatprep.subr.bf16.mxu0 %v1229
    %1293 = vmatpush1.bf16.msra.mxu0 %v1228
    %1294 = vmatprep.subr.bf16.mxu0 %v1231
    %1295 = vmatpush1.bf16.msra.mxu0 %v1230
    %1296 = vmatprep.subr.bf16.mxu0 %v1233
    %1297 = vmatpush1.bf16.msra.mxu0 %v1232
    %1298 = vmatprep.subr.bf16.mxu0 %v1235
    %1299 = vmatpush1.bf16.msra.mxu0 %v1234
    %1300 = vmatprep.subr.bf16.mxu0 %v1237
    %1301 = vmatpush1.bf16.msra.mxu0 %v1236
    %1302 = vmatprep.subr.bf16.mxu0 %v1239
    %1303 = vmatpush1.bf16.msra.mxu0 %v1238
    %1304 = vmatprep.subr.bf16.mxu0 %v1241
    %1305 = vmatpush1.bf16.msra.mxu0 %v1240
    %1306 = vmatprep.mubr.bf16.mxu0 %v844
    %1307 = vmatmul.mubr.bf16.gmra.mrb[0].mxu0 %v843
    %v1308 = vpop.f32.mrb[0].mxu0
    %v1309 = vadd.f32 %v1107, %v1308
    %v1310 = vpop.f32.mrb[0].mxu0
    %v1311 = vadd.f32 %v1111, %v1310
    %v1312 = vpop.f32.mrb[0].mxu0
    %v1313 = vadd.f32 %v1107, %v1312
    %v1314 = vpop.f32.mrb[0].mxu0
    %v1315 = vadd.f32 %v1111, %v1314
    %1316 = vmatprep.mubr.bf16.mxu0 %v846
    %1317 = vmatmul.mubr.bf16.gmra.mrb[0].mxu0 %v845
    %v1318 = vpop.f32.mrb[0].mxu0
    %v1319 = vadd.f32 %v1107, %v1318
    %v1320 = vpop.f32.mrb[0].mxu0
    %v1321 = vadd.f32 %v1111, %v1320
    %v1322 = vpop.f32.mrb[0].mxu0
    %v1323 = vadd.f32 %v1107, %v1322
    %v1324 = vpop.f32.mrb[0].mxu0
    %v1325 = vadd.f32 %v1111, %v1324
    %1326 = vmatprep.mubr.bf16.mxu0 %v848
    %1327 = vmatmul.mubr.bf16.gmra.mrb[0].mxu0 %v847
    %v1328 = vpop.f32.mrb[0].mxu0
    %v1329 = vadd.f32 %v1107, %v1328
    %v1330 = vpop.f32.mrb[0].mxu0
    %v1331 = vadd.f32 %v1111, %v1330
    %v1332 = vpop.f32.mrb[0].mxu0
    %v1333 = vadd.f32 %v1107, %v1332
    %v1334 = vpop.f32.mrb[0].mxu0
    %v1335 = vadd.f32 %v1111, %v1334
    %1336 = vmatprep.mubr.bf16.mxu0 %v850
    %1337 = vmatmul.mubr.bf16.gmra.mrb[0].mxu0 %v849
    %v1338 = vpop.f32.mrb[0].mxu0
    %v1339 = vadd.f32 %v1107, %v1338
    %v1340 = vpop.f32.mrb[0].mxu0
    %v1341 = vadd.f32 %v1111, %v1340
    %v1342 = vpop.f32.mrb[0].mxu0
    %v1343 = vadd.f32 %v1107, %v1342
    %v1344 = vpop.f32.mrb[0].mxu0
    %v1345 = vadd.f32 %v1111, %v1344
    %1346 = vmatprep.mubr.bf16.mxu0 %v852
    %1347 = vmatmul.mubr.bf16.gmra.mrb[0].mxu0 %v851
    %v1348 = vpop.f32.mrb[0].mxu0
    %v1349 = vadd.f32 %v1107, %v1348
    %v1350 = vpop.f32.mrb[0].mxu0
    %v1351 = vadd.f32 %v1111, %v1350
    %v1352 = vpop.f32.mrb[0].mxu0
    %v1353 = vadd.f32 %v1107, %v1352
    %v1354 = vpop.f32.mrb[0].mxu0
    %v1355 = vadd.f32 %v1111, %v1354
    %1356 = vmatprep.mubr.bf16.mxu0 %v854
    %1357 = vmatmul.mubr.bf16.gmra.mrb[0].mxu0 %v853
    %v1358 = vpop.f32.mrb[0].mxu0
    %v1359 = vadd.f32 %v1107, %v1358
    %v1360 = vpop.f32.mrb[0].mxu0
    %v1361 = vadd.f32 %v1111, %v1360
    %v1362 = vpop.f32.mrb[0].mxu0
    %v1363 = vadd.f32 %v1107, %v1362
    %v1364 = vpop.f32.mrb[0].mxu0
    %v1365 = vadd.f32 %v1111, %v1364
    %1366 = vmatprep.mubr.bf16.mxu0 %v856
    %1367 = vmatmul.mubr.bf16.gmra.mrb[0].mxu0 %v855
    %v1368 = vpop.f32.mrb[0].mxu0
    %v1369 = vadd.f32 %v1107, %v1368
    %v1370 = vpop.f32.mrb[0].mxu0
    %v1371 = vadd.f32 %v1111, %v1370
    %v1372 = vpop.f32.mrb[0].mxu0
    %v1373 = vadd.f32 %v1107, %v1372
    %v1374 = vpop.f32.mrb[0].mxu0
    %v1375 = vadd.f32 %v1111, %v1374
    %1376 = vmatprep.mubr.bf16.mxu0 %v858
    %1377 = vmatmul.mubr.bf16.gmra.mrb[0].mxu0 %v857
    %v1378 = vpop.f32.mrb[0].mxu0
    %v1379 = vadd.f32 %v1107, %v1378
    %v1380 = vpop.f32.mrb[0].mxu0
    %v1381 = vadd.f32 %v1111, %v1380
    %v1382 = vpop.f32.mrb[0].mxu0
    %v1383 = vadd.f32 %v1107, %v1382
    %v1384 = vpop.f32.mrb[0].mxu0
    %v1385 = vadd.f32 %v1111, %v1384
    %1386 = vmatprep.mubr.bf16.mxu0 %v1056
    %1387 = vmatmul.mubr.bf16.gmra.mrb[0].mxu0 %v1055
    %v1388 = vpop.f32.mrb[0].mxu0
    %v1389 = vadd.f32 %v1107, %v1388
    %v1390 = vpop.f32.mrb[0].mxu0
    %v1391 = vadd.f32 %v1111, %v1390
    %v1392 = vpop.f32.mrb[0].mxu0
    %v1393 = vadd.f32 %v1107, %v1392
    %v1394 = vpop.f32.mrb[0].mxu0
    %v1395 = vadd.f32 %v1111, %v1394
    %1396 = vmatprep.mubr.bf16.mxu0 %v1058
    %1397 = vmatmul.mubr.bf16.gmra.mrb[0].mxu0 %v1057
    %v1398 = vpop.f32.mrb[0].mxu0
    %v1399 = vadd.f32 %v1107, %v1398
    %v1400 = vpop.f32.mrb[0].mxu0
    %v1401 = vadd.f32 %v1111, %v1400
    %v1402 = vpop.f32.mrb[0].mxu0
    %v1403 = vadd.f32 %v1107, %v1402
    %v1404 = vpop.f32.mrb[0].mxu0
    %v1405 = vadd.f32 %v1111, %v1404
    %1406 = vmatprep.mubr.bf16.mxu0 %v1060
    %1407 = vmatmul.mubr.bf16.gmra.mrb[0].mxu0 %v1059
    %v1408 = vpop.f32.mrb[0].mxu0
    %v1409 = vadd.f32 %v1107, %v1408
    %v1410 = vpop.f32.mrb[0].mxu0
    %v1411 = vadd.f32 %v1111, %v1410
    %v1412 = vpop.f32.mrb[0].mxu0
    %v1413 = vadd.f32 %v1107, %v1412
    %v1414 = vpop.f32.mrb[0].mxu0
    %v1415 = vadd.f32 %v1111, %v1414
    %1416 = vmatprep.mubr.bf16.mxu0 %v1062
    %1417 = vmatmul.mubr.bf16.gmra.mrb[0].mxu0 %v1061
    %v1418 = vpop.f32.mrb[0].mxu0
    %v1419 = vadd.f32 %v1107, %v1418
    %v1420 = vpop.f32.mrb[0].mxu0
    %v1421 = vadd.f32 %v1111, %v1420
    %v1422 = vpop.f32.mrb[0].mxu0
    %v1423 = vadd.f32 %v1107, %v1422
    %v1424 = vpop.f32.mrb[0].mxu0
    %v1425 = vadd.f32 %v1111, %v1424
    %1426 = vmatprep.mubr.bf16.mxu0 %v1064
    %1427 = vmatmul.mubr.bf16.gmra.mrb[0].mxu0 %v1063
    %v1428 = vpop.f32.mrb[0].mxu0
    %v1429 = vadd.f32 %v1107, %v1428
    %v1430 = vpop.f32.mrb[0].mxu0
    %v1431 = vadd.f32 %v1111, %v1430
    %v1432 = vpop.f32.mrb[0].mxu0
    %v1433 = vadd.f32 %v1107, %v1432
    %v1434 = vpop.f32.mrb[0].mxu0
    %v1435 = vadd.f32 %v1111, %v1434
    %1436 = vmatprep.mubr.bf16.mxu0 %v1066
    %1437 = vmatmul.mubr.bf16.gmra.mrb[0].mxu0 %v1065
    %v1438 = vpop.f32.mrb[0].mxu0
    %v1439 = vadd.f32 %v1107, %v1438
    %v1440 = vpop.f32.mrb[0].mxu0
    %v1441 = vadd.f32 %v1111, %v1440
    %v1442 = vpop.f32.mrb[0].mxu0
    %v1443 = vadd.f32 %v1107, %v1442
    %v1444 = vpop.f32.mrb[0].mxu0
    %v1445 = vadd.f32 %v1111, %v1444
    %1446 = vmatprep.mubr.bf16.mxu0 %v1068
    %1447 = vmatmul.mubr.bf16.gmra.mrb[0].mxu0 %v1067
    %v1448 = vpop.f32.mrb[0].mxu0
    %v1449 = vadd.f32 %v1107, %v1448
    %v1450 = vpop.f32.mrb[0].mxu0
    %v1451 = vadd.f32 %v1111, %v1450
    %v1452 = vpop.f32.mrb[0].mxu0
    %v1453 = vadd.f32 %v1107, %v1452
    %v1454 = vpop.f32.mrb[0].mxu0
    %v1455 = vadd.f32 %v1111, %v1454
    %1456 = vmatprep.mubr.bf16.mxu0 %v1070
    %1457 = vmatmul.mubr.bf16.gmra.mrb[0].mxu0 %v1069
    %v1458 = vpop.f32.mrb[0].mxu0
    %v1459 = vadd.f32 %v1107, %v1458
    %v1460 = vpop.f32.mrb[0].mxu0
    %v1461 = vadd.f32 %v1111, %v1460
    %v1462 = vpop.f32.mrb[0].mxu0
    %v1463 = vadd.f32 %v1107, %v1462
    %v1464 = vpop.f32.mrb[0].mxu0
    %v1465 = vadd.f32 %v1111, %v1464
    %1466 = vdwg.mxu0
    %v1467 = vmax.f32 %v1309, 0.0
    %v1468 = vmax.f32 %v1311, 0.0
    %v1469 = vmax.f32 %v1313, 0.0
    %v1470 = vmax.f32 %v1315, 0.0
    %v1471 = vmax.f32 %v1319, 0.0
    %v1472 = vmax.f32 %v1321, 0.0
    %v1473 = vmax.f32 %v1323, 0.0
    %v1474 = vmax.f32 %v1325, 0.0
    %v1475 = vmax.f32 %v1329, 0.0
    %v1476 = vmax.f32 %v1331, 0.0
    %v1477 = vmax.f32 %v1333, 0.0
    %v1478 = vmax.f32 %v1335, 0.0
    %v1479 = vmax.f32 %v1339, 0.0
    %v1480 = vmax.f32 %v1341, 0.0
    %v1481 = vmax.f32 %v1343, 0.0
    %v1482 = vmax.f32 %v1345, 0.0
    %v1483 = vmax.f32 %v1349, 0.0
    %v1484 = vmax.f32 %v1351, 0.0
    %v1485 = vmax.f32 %v1353, 0.0
    %v1486 = vmax.f32 %v1355, 0.0
    %v1487 = vmax.f32 %v1359, 0.0
    %v1488 = vmax.f32 %v1361, 0.0
    %v1489 = vmax.f32 %v1363, 0.0
    %v1490 = vmax.f32 %v1365, 0.0
    %v1491 = vmax.f32 %v1369, 0.0
    %v1492 = vmax.f32 %v1371, 0.0
    %v1493 = vmax.f32 %v1373, 0.0
    %v1494 = vmax.f32 %v1375, 0.0
    %v1495 = vmax.f32 %v1379, 0.0
    %v1496 = vmax.f32 %v1381, 0.0
    %v1497 = vmax.f32 %v1383, 0.0
    %v1498 = vmax.f32 %v1385, 0.0
    %v1499 = vmax.f32 %v1389, 0.0
    %v1500 = vmax.f32 %v1391, 0.0
    %v1501 = vmax.f32 %v1393, 0.0
    %v1502 = vmax.f32 %v1395, 0.0
    %v1503 = vmax.f32 %v1399, 0.0
    %v1504 = vmax.f32 %v1401, 0.0
    %v1505 = vmax.f32 %v1403, 0.0
    %v1506 = vmax.f32 %v1405, 0.0
    %v1507 = vmax.f32 %v1409, 0.0
    %v1508 = vmax.f32 %v1411, 0.0
    %v1509 = vmax.f32 %v1413, 0.0
    %v1510 = vmax.f32 %v1415, 0.0
    %v1511 = vmax.f32 %v1419, 0.0
    %v1512 = vmax.f32 %v1421, 0.0
    %v1513 = vmax.f32 %v1423, 0.0
    %v1514 = vmax.f32 %v1425, 0.0
    %v1515 = vmax.f32 %v1429, 0.0
    %v1516 = vmax.f32 %v1431, 0.0
    %v1517 = vmax.f32 %v1433, 0.0
    %v1518 = vmax.f32 %v1435, 0.0
    %v1519 = vmax.f32 %v1439, 0.0
    %v1520 = vmax.f32 %v1441, 0.0
    %v1521 = vmax.f32 %v1443, 0.0
    %v1522 = vmax.f32 %v1445, 0.0
    %v1523 = vmax.f32 %v1449, 0.0
    %v1524 = vmax.f32 %v1451, 0.0
    %v1525 = vmax.f32 %v1453, 0.0
    %v1526 = vmax.f32 %v1455, 0.0
    %v1527 = vmax.f32 %v1459, 0.0
    %v1528 = vmax.f32 %v1461, 0.0
    %v1529 = vmax.f32 %v1463, 0.0
    %v1530 = vmax.f32 %v1465, 0.0
    %v1531 = vpack.c.bf16 %v1469, %v1467
    %v1532 = vpack.c.bf16 %v1470, %v1468
    %v1533 = vpack.c.bf16 %v1473, %v1471
    %v1534 = vpack.c.bf16 %v1474, %v1472
    %v1535 = vpack.c.bf16 %v1477, %v1475
    %v1536 = vpack.c.bf16 %v1478, %v1476
    %v1537 = vpack.c.bf16 %v1481, %v1479
    %v1538 = vpack.c.bf16 %v1482, %v1480
    %v1539 = vpack.c.bf16 %v1485, %v1483
    %v1540 = vpack.c.bf16 %v1486, %v1484
    %v1541 = vpack.c.bf16 %v1489, %v1487
    %v1542 = vpack.c.bf16 %v1490, %v1488
    %v1543 = vpack.c.bf16 %v1493, %v1491
    %v1544 = vpack.c.bf16 %v1494, %v1492
    %v1545 = vpack.c.bf16 %v1497, %v1495
    %v1546 = vpack.c.bf16 %v1498, %v1496
    %v1547 = vpack.c.bf16 %v1501, %v1499
    %v1548 = vpack.c.bf16 %v1502, %v1500
    %v1549 = vpack.c.bf16 %v1505, %v1503
    %v1550 = vpack.c.bf16 %v1506, %v1504
    %v1551 = vpack.c.bf16 %v1509, %v1507
    %v1552 = vpack.c.bf16 %v1510, %v1508
    %v1553 = vpack.c.bf16 %v1513, %v1511
    %v1554 = vpack.c.bf16 %v1514, %v1512
    %v1555 = vpack.c.bf16 %v1517, %v1515
    %v1556 = vpack.c.bf16 %v1518, %v1516
    %v1557 = vpack.c.bf16 %v1521, %v1519
    %v1558 = vpack.c.bf16 %v1522, %v1520
    %v1559 = vpack.c.bf16 %v1525, %v1523
    %v1560 = vpack.c.bf16 %v1526, %v1524
    %v1561 = vpack.c.bf16 %v1529, %v1527
    %v1562 = vpack.c.bf16 %v1530, %v1528
    %v1563 = vld [vmem:[%s7] sm:$0x3]
    %s1564 = sld [smem:[#allocation2]]
    %v1565 = vstv %s1564
    %v1568 = vunpack.c.l.s4 1966171168
    %v1569 = vunpack.c.0.s8 %v1568
    %v1570 = vlaneseq
    %v1571 = vshrl.u32 %v1570, 7
    %v1572 = vsub.s32 %v1569, %v1571
    %v1573 = vrot.slane %v1563, %v1572
    %v1574 = vcombine.high %v1573, %v1573
    %v1576 = vunpack.c.l.s4 1966171168
    %v1577 = vunpack.c.0.s8 %v1576
    %v1578 = vlaneseq
    %v1579 = vshrl.u32 %v1578, 7
    %v1580 = vsub.s32 %v1577, %v1579
    %v1581 = vrot.slane %v1573, %v1580
    %v1583 = vunpack.c.l.s4 1966171168
    %v1584 = vunpack.c.0.s8 %v1583
    %v1585 = vlaneseq
    %v1586 = vshrl.u32 %v1585, 7
    %v1587 = vsub.s32 %v1584, %v1586
    %v1588 = vrot.slane %v1574, %v1587
    %1591 = vmatprep.subr.bf16.mxu0 %v1532
    %1592 = vmatpush1.bf16.xpose.msra.mxu0 %v1531
    %1593 = vmatprep.subr.bf16.mxu0 %v1534
    %1594 = vmatpush1.bf16.xpose.msra.mxu0 %v1533
    %1595 = vmatprep.subr.bf16.mxu0 %v1536
    %1596 = vmatpush1.bf16.xpose.msra.mxu0 %v1535
    %1597 = vmatprep.subr.bf16.mxu0 %v1538
    %1598 = vmatpush1.bf16.xpose.msra.mxu0 %v1537
    %1599 = vmatprep.subr.bf16.mxu0 %v1540
    %1600 = vmatpush1.bf16.xpose.msra.mxu0 %v1539
    %1601 = vmatprep.subr.bf16.mxu0 %v1542
    %1602 = vmatpush1.bf16.xpose.msra.mxu0 %v1541
    %1603 = vmatprep.subr.bf16.mxu0 %v1544
    %1604 = vmatpush1.bf16.xpose.msra.mxu0 %v1543
    %1605 = vmatprep.subr.bf16.mxu0 %v1546
    %1606 = vmatpush1.bf16.xpose.msra.mxu0 %v1545
    %1607 = vmatprep.subr.bf16.mxu0 %v1548
    %1608 = vmatpush1.bf16.xpose.msra.mxu0 %v1547
    %1609 = vmatprep.subr.bf16.mxu0 %v1550
    %1610 = vmatpush1.bf16.xpose.msra.mxu0 %v1549
    %1611 = vmatprep.subr.bf16.mxu0 %v1552
    %1612 = vmatpush1.bf16.xpose.msra.mxu0 %v1551
    %1613 = vmatprep.subr.bf16.mxu0 %v1554
    %1614 = vmatpush1.bf16.xpose.msra.mxu0 %v1553
    %1615 = vmatprep.subr.bf16.mxu0 %v1556
    %1616 = vmatpush1.bf16.xpose.msra.mxu0 %v1555
    %1617 = vmatprep.subr.bf16.mxu0 %v1558
    %1618 = vmatpush1.bf16.xpose.msra.mxu0 %v1557
    %1619 = vmatprep.subr.bf16.mxu0 %v1560
    %1620 = vmatpush1.bf16.xpose.msra.mxu0 %v1559
    %1621 = vmatprep.subr.bf16.mxu0 %v1562
    %1622 = vmatpush1.bf16.xpose.msra.mxu0 %v1561
    %1623 = vmatprep.mubr.bf16.mxu0 %v1588
    %1624 = vmatmul.mubr.bf16.gmra.mrb[0].mxu0 %v1581
    %v1625 = vpop.f32.mrb[0].mxu0
    %v1626 = vadd.f32 %v1565, %v1625
    %v1627 = vpop.f32.mrb[0].mxu0
    %v1628 = vadd.f32 %v1565, %v1627
    %v1629 = vpop.f32.mrb[0].mxu0
    %v1630 = vpop.f32.mrb[0].mxu0
    %1631 = vdwg.mxu0
    %v1634 = vcombine.low %v1626, %v1628
    %v1636 = vunpack.c.l.s4 1966171168
    %v1637 = vunpack.c.0.s8 %v1636
    %v1638 = vlaneseq
    %v1639 = vshrl.u32 %v1638, 7
    %v1640 = vsub.s32 %v1637, %v1639
    %v1641 = vrot.slane %v1634, %v1640
    %v1643 = vunpack.c.l.s4 1966171168
    %v1644 = vunpack.c.0.s8 %v1643
    %v1645 = vlaneseq
    %v1646 = vshrl.u32 %v1645, 7
    %v1647 = vsub.s32 %v1644, %v1646
    %v1648 = vrot.slane %v1641, %v1647
    %v1650 = vlaneseq
    %vm1651 = vcmp.ge.s32.totalorder %v1650, 0
    %vm1652 = vcmp.lt.s32.totalorder %v1650, 256
    %vm1653 = vmand %vm1651, %vm1652
    %1654 = vst.msk [vmem:[#allocation11] sm:$0x3] %vm1653, %v1648
    // Predicated region
    $region58: #{tpu_custom_call.1} parent=1 // pred_check
      _
    $region59: #{tpu_custom_call.1} parent=1 // pred_check_branch
      %1656 = sbr.rel (0) target = $region61
    $region60: #{tpu_custom_call.1} parent=1 // pred_region
      %s1658 = ssub.s32 32, 32
      %1659 = vsyncadd [#allocation5], %s1658
      %s1661 = sshll.u32 [#allocation11], 4
      %s1662 = int_to_ptr.vmem [resolvable:$true] %s1661
      %1664 = dma.vmem_to_hbm [thread:$0]  %s1662, 32, %s10, [#allocation5]
    $region61: #{tpu_custom_call.1} parent=1 // pred_fallthru
      _
    // Predicated region
    $region62: #{tpu_custom_call.1} parent=1 // pred_check
      _
    $region63: #{tpu_custom_call.1} parent=1 // pred_check_branch
      %1666 = sbr.rel (0) target = $region65
    $region64: #{tpu_custom_call.1} parent=1 // pred_region
      %1667 = dma.done [#allocation5], 32
    $region65: #{tpu_custom_call.1} parent=1 // pred_fallthru
      _
    %1668 = vsyncpa [#allocation4], 1
    %1669 = vsyncpa [#allocation7], 1
    %1670 = vsyncpa [#allocation10], 1
    %1671 = vsyncpa [#allocation5], 1

</llo_original>
